<compile_context>
chip_gen: v7x
topology: tpu7x:2x2x1
jax: 0.10.0
libtpu: 0.0.40
codegen_flags: <defaults>
</compile_context>

<pallas_src>
import functools

import jax
import jax.numpy as jnp
from jax.experimental import pallas as pl
from jax.experimental.pallas import tpu as pltpu


def _round_up(v, m):
    return ((v + m - 1) // m) * m


def _finish(h_f32, w2_ref, b2_ref, o_ref, return_prob):
    """Layer 2 (+bias, + optional sigmoid) on the f32 accumulator."""
    out = jnp.dot(h_f32.astype(w2_ref.dtype), w2_ref[...],
                  preferred_element_type=jnp.float32) + b2_ref[...]
    if return_prob:
        out = 1.0 / (1.0 + jnp.exp(-out))      # exact sigmoid (EUP exp)
    o_ref[...] = out.astype(o_ref.dtype)


def _onehot(idx_ref, n_nodes, dtype):
    """[te,1] int32 indices -> [te, n_nodes] one-hot matrix (VPU, no gather)."""
    te = idx_ref.shape[0]
    lanes = jax.lax.broadcasted_iota(jnp.int32, (te, n_nodes), 1)
    return jnp.where(idx_ref[...] == lanes, 1.0, 0.0).astype(dtype)


# ---------------- in-kernel one-hot gather (node table resident in VMEM) ----

def _onehot_concat_kernel(si_ref, di_ref, ps_ref, pd_ref, b1_ref, w2_ref,
                          b2_ref, o_ref, *, n_nodes, return_prob):
    # concat([x[src], x[dst]], -1) @ W1
    #   == onehot(src) @ (X @ W1[:D]) + onehot(dst) @ (X @ W1[D:])
    oh_s = _onehot(si_ref, n_nodes, ps_ref.dtype)
    h = jnp.dot(oh_s, ps_ref[...], preferred_element_type=jnp.float32)
    oh_d = _onehot(di_ref, n_nodes, pd_ref.dtype)
    h = h + jnp.dot(oh_d, pd_ref[...], preferred_element_type=jnp.float32)
    h = jnp.maximum(h + b1_ref[...], 0.0)
    _finish(h, w2_ref, b2_ref, o_ref, return_prob)


def _onehot_elem_kernel(si_ref, di_ref, x_ref, w1_ref, b1_ref, w2_ref,
                        b2_ref, o_ref, *, n_nodes, agg, return_prob):
    oh_s = _onehot(si_ref, n_nodes, x_ref.dtype)
    xs = jnp.dot(oh_s, x_ref[...], preferred_element_type=jnp.float32)
    oh_d = _onehot(di_ref, n_nodes, x_ref.dtype)
    xd = jnp.dot(oh_d, x_ref[...], preferred_element_type=jnp.float32)
    e = xs * xd if agg == "mul" else xs + xd          # f32 elementwise
    h = jnp.dot(e.astype(w1_ref.dtype), w1_ref[...],
                preferred_element_type=jnp.float32)
    h = jnp.maximum(h + b1_ref[...], 0.0)
    _finish(h, w2_ref, b2_ref, o_ref, return_prob)


# ---------------- pre-gathered (XLA gather) path, for large node tables -----

def _gathered_concat_kernel(xs_ref, xd_ref, w1s_ref, w1d_ref, b1_ref, w2_ref,
                            b2_ref, o_ref, *, return_prob):
    h = jnp.dot(xs_ref[...], w1s_ref[...], preferred_element_type=jnp.float32)
    h = h + jnp.dot(xd_ref[...], w1d_ref[...],
                    preferred_element_type=jnp.float32)
    h = jnp.maximum(h + b1_ref[...], 0.0)
    _finish(h, w2_ref, b2_ref, o_ref, return_prob)


def _gathered_elem_kernel(xs_ref, xd_ref, w1_ref, b1_ref, w2_ref, b2_ref,
                          o_ref, *, agg, return_prob):
    xs = xs_ref[...].astype(jnp.float32)
    xd = xd_ref[...].astype(jnp.float32)
    e = xs * xd if agg == "mul" else xs + xd
    h = jnp.dot(e.astype(w1_ref.dtype), w1_ref[...],
                preferred_element_type=jnp.float32)
    h = jnp.maximum(h + b1_ref[...], 0.0)
    _finish(h, w2_ref, b2_ref, o_ref, return_prob)


# ---------------- wrapper -----------------------------------------------------

@functools.partial(
    jax.jit,
    static_argnames=("agg", "return_prob", "stop_grad", "te", "compute_dtype",
                     "gather"))
def edge_regression_head(x, src, dst, params, *, agg="concat",
                         return_prob=False, stop_grad=False, te=512,
                         compute_dtype=None, gather="auto"):
    """Pallas implementation of EdgeRegressionHead.forward.

    x: [N, D] node embeddings; src/dst: [E] int edge endpoints.
    params: dict with w1 [in_ch, H], b1 [H], w2 [H, O], b2 [O].
    te: edge tile (rows per grid step), multiple of 8 (ideally 256/512).
    compute_dtype: optional matmul-input dtype (e.g. jnp.bfloat16); f32 acc.
    gather: 'auto' | 'onehot' (in-kernel, small node tables) | 'xla'.
    """
    if agg not in ("concat", "mul", "sum"):
        raise NotImplementedError(f"Unsupported aggregation {agg}")
    if stop_grad:
        x = jax.lax.stop_gradient(x)

    E = src.shape[0]
    N, D = x.shape
    H = params["w1"].shape[1]
    O = params["w2"].shape[1]
    mm_dtype = x.dtype if compute_dtype is None else compute_dtype

    # Edge tile: large enough to amortize per-step pipeline overhead, clamped
    # so tiny edge lists aren't padded to a full tile.
    te = max(8, min(te, _round_up(E, 8)))
    E_pad = _round_up(E, te)

    if gather == "auto":
        # One-hot gather keeps the node (or X@W1) table resident in VMEM and
        # only streams 8 B/edge of indices; worth it while the [te, N] one-hot
        # temporaries stay small.
        gather = "onehot" if N <= 1024 else "xla"

    src = src.astype(jnp.int32)
    dst = dst.astype(jnp.int32)
    if E_pad != E:
        pad = E_pad - E
        src = jnp.pad(src, (0, pad))        # padded edges read node 0,
        dst = jnp.pad(dst, (0, pad))        # sliced off below.

    b1 = params["b1"].astype(jnp.float32).reshape(1, H)
    b2 = params["b2"].astype(jnp.float32).reshape(1, O)
    w2 = params["w2"].astype(mm_dtype)
    w1 = params["w1"]

    # O (=8) is narrow -> masked vst, but output bytes are a small fraction of
    # input bytes, so lane-folding the output is not worth an in-kernel
    # relayout.
    out_spec = pl.BlockSpec((te, O), lambda i: (i, 0))
    edge_spec = pl.BlockSpec((te, D), lambda i: (i, 0))
    idx_spec = pl.BlockSpec((te, 1), lambda i: (i, 0))

    def res(shape):                      # grid-resident (fetched once) block
        return pl.BlockSpec(shape, lambda i: (0, 0))

    if gather == "onehot":
        src2 = src.reshape(E_pad, 1)
        dst2 = dst.reshape(E_pad, 1)
        if agg == "concat":
            # Fold the node table through layer 1 once in the wrapper (tiny
            # [N,D]x[D,H] matmuls, full f32 precision), keep [N,H] resident.
            xf = x.astype(jnp.float32)
            w1f = w1.astype(jnp.float32)
            p_src = jnp.dot(xf, w1f[:D],
                            precision=jax.lax.Precision.HIGHEST).astype(mm_dtype)
            p_dst = jnp.dot(xf, w1f[D:],
                            precision=jax.lax.Precision.HIGHEST).astype(mm_dtype)
            kernel = functools.partial(_onehot_concat_kernel, n_nodes=N,
                                       return_prob=return_prob)
            operands = (src2, dst2, p_src, p_dst, b1, w2, b2)
            in_specs = [idx_spec, idx_spec, res((N, H)), res((N, H)),
                        res((1, H)), res((H, O)), res((1, O))]
        else:
            kernel = functools.partial(_onehot_elem_kernel, n_nodes=N,
                                       agg=agg, return_prob=return_prob)
            operands = (src2, dst2, x.astype(mm_dtype), w1.astype(mm_dtype),
                        b1, w2, b2)
            in_specs = [idx_spec, idx_spec, res((N, D)), res((D, H)),
                        res((1, H)), res((H, O)), res((1, O))]
    else:
        # Row gather in plain JAX, fused into the same jit program.
        xm = x.astype(mm_dtype)
        x_src = jnp.take(xm, src, axis=0)   # [E_pad, D]
        x_dst = jnp.take(xm, dst, axis=0)   # [E_pad, D]
        if agg == "concat":
            w1m = w1.astype(mm_dtype)
            kernel = functools.partial(_gathered_concat_kernel,
                                       return_prob=return_prob)
            operands = (x_src, x_dst, w1m[:D], w1m[D:], b1, w2, b2)
            in_specs = [edge_spec, edge_spec, res((D, H)), res((D, H)),
                        res((1, H)), res((H, O)), res((1, O))]
        else:
            kernel = functools.partial(_gathered_elem_kernel, agg=agg,
                                       return_prob=return_prob)
            operands = (x_src, x_dst, w1.astype(mm_dtype), b1, w2, b2)
            in_specs = [edge_spec, edge_spec, res((D, H)), res((1, H)),
                        res((H, O)), res((1, O))]

    out = pl.pallas_call(
        kernel,
        out_shape=jax.ShapeDtypeStruct((E_pad, O), x.dtype),
        grid_spec=pltpu.PrefetchScalarGridSpec(
            num_scalar_prefetch=0,
            grid=(E_pad // te,),
            in_specs=in_specs,
            out_specs=out_spec,
        ),
        compiler_params=pltpu.CompilerParams(
            dimension_semantics=("parallel",)),
    )(*operands)

    return out[:E]


def init_params(key, in_channels, hidden_channels, out_channels):
    """torch.nn.Linear-style init: U(-k, k), k = 1/sqrt(fan_in)."""
    k1, k2, k3, k4 = jax.random.split(key, 4)
    lim1 = 1.0 / jnp.sqrt(in_channels)
    lim2 = 1.0 / jnp.sqrt(hidden_channels)
    return {
        "w1": jax.random.uniform(k1, (in_channels, hidden_channels),
                                 jnp.float32, -lim1, lim1),
        "b1": jax.random.uniform(k2, (hidden_channels,), jnp.float32,
                                 -lim1, lim1),
        "w2": jax.random.uniform(k3, (hidden_channels, out_channels),
                                 jnp.float32, -lim2, lim2),
        "b2": jax.random.uniform(k4, (out_channels,), jnp.float32,
                                 -lim2, lim2),
    }


def _reference(x, src, dst, params, agg="concat"):
    xs, xd = x[src], x[dst]
    if agg == "concat":
        e = jnp.concatenate([xs, xd], axis=-1)
    elif agg == "mul":
        e = xs * xd
    else:
        e = xs + xd
    h = jnp.maximum(
        jnp.dot(e, params["w1"], precision=jax.lax.Precision.HIGHEST)
        + params["b1"], 0.0)
    return (jnp.dot(h, params["w2"], precision=jax.lax.Precision.HIGHEST)
            + params["b2"])


if __name__ == "__main__":
    # EdgeRegressionHead(num_layers=2, input_dim=32, output_dim=8)
    N, D, E, O = 64, 32, 1000, 8
    hidden = D

    key = jax.random.PRNGKey(0)
    kx, ks, kd, kp, kq = jax.random.split(key, 5)
    x = jax.random.normal(kx, (N, D), jnp.float32)
    src = jax.random.randint(ks, (E,), 0, N, jnp.int32)
    dst = jax.random.randint(kd, (E,), 0, N, jnp.int32)

    params_c = init_params(kp, 2 * D, hidden, O)   # agg='concat' -> in_ch=2D
    params_m = init_params(kq, D, hidden, O)       # agg='mul'/'sum' -> in_ch=D

    ref_c = _reference(x, src, dst, params_c, agg="concat")
    ref_m = _reference(x, src, dst, params_m, agg="mul")
    ref_s = _reference(x, src, dst, params_m, agg="sum")

    # concat, auto -> in-kernel one-hot gather (node table is tiny here)
    out_c = jax.block_until_ready(
        edge_regression_head(x, src, dst, params_c, agg="concat"))
    assert out_c.shape == (E, O), out_c.shape
    err = float(jnp.max(jnp.abs(out_c - ref_c)))
    assert jnp.allclose(out_c, ref_c, atol=2e-4, rtol=2e-4), err

    # concat, explicit XLA-gather path (used automatically for large N)
    out_cx = jax.block_until_ready(
        edge_regression_head(x, src, dst, params_c, agg="concat", gather="xla"))
    err = float(jnp.max(jnp.abs(out_cx - ref_c)))
    assert jnp.allclose(out_cx, ref_c, atol=2e-4, rtol=2e-4), err

    # mul (one-hot path) and sum (xla path)
    out_m = jax.block_until_ready(
        edge_regression_head(x, src, dst, params_m, agg="mul"))
    err = float(jnp.max(jnp.abs(out_m - ref_m)))
    assert jnp.allclose(out_m, ref_m, atol=2e-4, rtol=2e-4), err

    out_s = jax.block_until_ready(
        edge_regression_head(x, src, dst, params_m, agg="sum", gather="xla"))
    err = float(jnp.max(jnp.abs(out_s - ref_s)))
    assert jnp.allclose(out_s, ref_s, atol=2e-4, rtol=2e-4), err

    # return_prob=True (sigmoid fused in-kernel)
    out_p = jax.block_until_ready(
        edge_regression_head(x, src, dst, params_c, agg="concat",
                             return_prob=True))
    ref_p = jax.nn.sigmoid(ref_c)
    err = float(jnp.max(jnp.abs(out_p - ref_p)))
    assert jnp.allclose(out_p, ref_p, atol=2e-4, rtol=2e-4), err

    print("KERNEL_OK")
</pallas_src>

<mosaic_0001>
module attributes {stable_mosaic.version = 11 : i64} {
  func.func @_onehot_concat_kernel(%arg0: i32, %arg1: memref<512x1xi32, #tpu.memory_space<vmem>>, %arg2: memref<512x1xi32, #tpu.memory_space<vmem>>, %arg3: memref<64x32xf32, #tpu.memory_space<vmem>>, %arg4: memref<64x32xf32, #tpu.memory_space<vmem>>, %arg5: memref<1x32xf32, #tpu.memory_space<vmem>>, %arg6: memref<32x8xf32, #tpu.memory_space<vmem>>, %arg7: memref<1x8xf32, #tpu.memory_space<vmem>>, %arg8: memref<512x8xf32, #tpu.memory_space<vmem>>) attributes {dimension_semantics = [#tpu.dimension_semantics<parallel>], iteration_bounds = array<i64: 2>, scalar_prefetch = 0 : i64, scratch_operands = 0 : i64, tpu.core_type = #tpu.core_type<tc>, window_params = [{transform_indices = @transform_0, window_bounds = array<i64: 512, 1>}, {transform_indices = @transform_1, window_bounds = array<i64: 512, 1>}, {pipeline_mode = #tpu.pipeline_mode<synchronous>, transform_indices = @transform_2, window_bounds = array<i64: 64, 32>}, {pipeline_mode = #tpu.pipeline_mode<synchronous>, transform_indices = @transform_3, window_bounds = array<i64: 64, 32>}, {pipeline_mode = #tpu.pipeline_mode<synchronous>, transform_indices = @transform_4, window_bounds = array<i64: 1, 32>}, {pipeline_mode = #tpu.pipeline_mode<synchronous>, transform_indices = @transform_5, window_bounds = array<i64: 32, 8>}, {pipeline_mode = #tpu.pipeline_mode<synchronous>, transform_indices = @transform_6, window_bounds = array<i64: 1, 8>}, {transform_indices = @transform_7, window_bounds = array<i64: 512, 8>}]} {
    %0 = tpu.iota {dimensions = array<i32: 1>} : vector<512x64xi32>
    %c0 = arith.constant 0 : index
    %c0_0 = arith.constant 0 : index
    %1 = vector.load %arg1[%c0, %c0_0] : memref<512x1xi32, #tpu.memory_space<vmem>>, vector<512x1xi32>
    %2 = vector.broadcast %1 : vector<512x1xi32> to vector<512x64xi32>
    %3 = arith.cmpi eq, %2, %0 : vector<512x64xi32>
    %cst = arith.constant 1.000000e+00 : f32
    %cst_1 = arith.constant 0.000000e+00 : f32
    %4 = vector.broadcast %cst : f32 to vector<512x64xf32>
    %5 = vector.broadcast %cst_1 : f32 to vector<512x64xf32>
    %6 = arith.select %3, %4, %5 : vector<512x64xi1>, vector<512x64xf32>
    %c0_2 = arith.constant 0 : index
    %c0_3 = arith.constant 0 : index
    %7 = vector.load %arg3[%c0_2, %c0_3] : memref<64x32xf32, #tpu.memory_space<vmem>>, vector<64x32xf32>
    %cst_4 = arith.constant dense<0.000000e+00> : vector<512x32xf32>
    %8 = tpu.matmul %6, %7, %cst_4 {dimension_numbers = #tpu.dot_dimension_numbers<[1], [0], [0], [1], [0, 0, 1, 1], [], []>} : vector<512x64xf32>, vector<64x32xf32>, vector<512x32xf32> -> vector<512x32xf32>
    %9 = tpu.iota {dimensions = array<i32: 1>} : vector<512x64xi32>
    %c0_5 = arith.constant 0 : index
    %c0_6 = arith.constant 0 : index
    %10 = vector.load %arg2[%c0_5, %c0_6] : memref<512x1xi32, #tpu.memory_space<vmem>>, vector<512x1xi32>
    %11 = vector.broadcast %10 : vector<512x1xi32> to vector<512x64xi32>
    %12 = arith.cmpi eq, %11, %9 : vector<512x64xi32>
    %cst_7 = arith.constant 1.000000e+00 : f32
    %cst_8 = arith.constant 0.000000e+00 : f32
    %13 = vector.broadcast %cst_7 : f32 to vector<512x64xf32>
    %14 = vector.broadcast %cst_8 : f32 to vector<512x64xf32>
    %15 = arith.select %12, %13, %14 : vector<512x64xi1>, vector<512x64xf32>
    %c0_9 = arith.constant 0 : index
    %c0_10 = arith.constant 0 : index
    %16 = vector.load %arg4[%c0_9, %c0_10] : memref<64x32xf32, #tpu.memory_space<vmem>>, vector<64x32xf32>
    %cst_11 = arith.constant dense<0.000000e+00> : vector<512x32xf32>
    %17 = tpu.matmul %15, %16, %cst_11 {dimension_numbers = #tpu.dot_dimension_numbers<[1], [0], [0], [1], [0, 0, 1, 1], [], []>} : vector<512x64xf32>, vector<64x32xf32>, vector<512x32xf32> -> vector<512x32xf32>
    %18 = arith.addf %8, %17 : vector<512x32xf32>
    %c0_12 = arith.constant 0 : index
    %c0_13 = arith.constant 0 : index
    %19 = vector.load %arg5[%c0_12, %c0_13] : memref<1x32xf32, #tpu.memory_space<vmem>>, vector<1x32xf32>
    %20 = vector.broadcast %19 : vector<1x32xf32> to vector<512x32xf32>
    %21 = arith.addf %18, %20 : vector<512x32xf32>
    %cst_14 = arith.constant 0.000000e+00 : f32
    %22 = vector.broadcast %cst_14 : f32 to vector<512x32xf32>
    %23 = arith.maximumf %21, %22 : vector<512x32xf32>
    %c0_15 = arith.constant 0 : index
    %c0_16 = arith.constant 0 : index
    %24 = vector.load %arg6[%c0_15, %c0_16] : memref<32x8xf32, #tpu.memory_space<vmem>>, vector<32x8xf32>
    %cst_17 = arith.constant dense<0.000000e+00> : vector<512x8xf32>
    %25 = tpu.matmul %23, %24, %cst_17 {dimension_numbers = #tpu.dot_dimension_numbers<[1], [0], [0], [1], [0, 0, 1, 1], [], []>} : vector<512x32xf32>, vector<32x8xf32>, vector<512x8xf32> -> vector<512x8xf32>
    %c0_18 = arith.constant 0 : index
    %c0_19 = arith.constant 0 : index
    %26 = vector.load %arg7[%c0_18, %c0_19] : memref<1x8xf32, #tpu.memory_space<vmem>>, vector<1x8xf32>
    %27 = vector.broadcast %26 : vector<1x8xf32> to vector<512x8xf32>
    %28 = arith.addf %25, %27 : vector<512x8xf32>
    %c0_20 = arith.constant 0 : index
    %c0_21 = arith.constant 0 : index
    %29 = vector.load %arg8[%c0_20, %c0_21] : memref<512x8xf32, #tpu.memory_space<vmem>>, vector<512x8xf32>
    tpu.vector_store %arg8[%c0_20, %c0_21], %28 {strides = array<i32>} : memref<512x8xf32, #tpu.memory_space<vmem>>, vector<512x8xf32>,
    return
  }
  func.func @transform_0(%arg0: i32) -> (i32, i32) {
    %c0_i32 = arith.constant 0 : i32
    %c0_i32_0 = arith.constant 0 : i32
    return %arg0, %c0_i32 : i32, i32
  }
  func.func @transform_1(%arg0: i32) -> (i32, i32) {
    %c0_i32 = arith.constant 0 : i32
    %c0_i32_0 = arith.constant 0 : i32
    return %arg0, %c0_i32 : i32, i32
  }
  func.func @transform_2(%arg0: i32) -> (i32, i32) {
    %c0_i32 = arith.constant 0 : i32
    %c0_i32_0 = arith.constant 0 : i32
    %c0_i32_1 = arith.constant 0 : i32
    return %c0_i32, %c0_i32_0 : i32, i32
  }
  func.func @transform_3(%arg0: i32) -> (i32, i32) {
    %c0_i32 = arith.constant 0 : i32
    %c0_i32_0 = arith.constant 0 : i32
    %c0_i32_1 = arith.constant 0 : i32
    return %c0_i32, %c0_i32_0 : i32, i32
  }
  func.func @transform_4(%arg0: i32) -> (i32, i32) {
    %c0_i32 = arith.constant 0 : i32
    %c0_i32_0 = arith.constant 0 : i32
    %c0_i32_1 = arith.constant 0 : i32
    return %c0_i32, %c0_i32_0 : i32, i32
  }
  func.func @transform_5(%arg0: i32) -> (i32, i32) {
    %c0_i32 = arith.constant 0 : i32
    %c0_i32_0 = arith.constant 0 : i32
    %c0_i32_1 = arith.constant 0 : i32
    return %c0_i32, %c0_i32_0 : i32, i32
  }
  func.func @transform_6(%arg0: i32) -> (i32, i32) {
    %c0_i32 = arith.constant 0 : i32
    %c0_i32_0 = arith.constant 0 : i32
    %c0_i32_1 = arith.constant 0 : i32
    return %c0_i32, %c0_i32_0 : i32, i32
  }
  func.func @transform_7(%arg0: i32) -> (i32, i32) {
    %c0_i32 = arith.constant 0 : i32
    %c0_i32_0 = arith.constant 0 : i32
    return %arg0, %c0_i32 : i32, i32
  }
}

</mosaic_0001>

<llo_original>
// kernel: edge_regression_head.1
$region0: #{edge_regression_head.1}
  #allocation0 [shape = 'u32[]', space=smem, size = 0x4, offset = 0x4, fixed_abs, tag = 'smem constant byte address 0x4 - core index']
  #allocation1 [shape = 'u32[144,128]{1,0:T(1,128)}', space=vmem, size = 0x12000, scoped, tag = 'internal scratch']
  %s0 = inlined_call_operand.vmem [shape: s32[1024,1], index: 0, kind: input, shape index: {}]
  %s1 = inlined_call_operand.vmem [shape: s32[1024,1], index: 1, kind: input, shape index: {}]
  %s2 = inlined_call_operand.vmem [shape: f32[64,32], index: 2, kind: input, shape index: {}]
  %s3 = inlined_call_operand.vmem [shape: f32[64,32], index: 3, kind: input, shape index: {}]
  %s4 = inlined_call_operand.vmem [shape: f32[1,32], index: 4, kind: input, shape index: {}]
  %s5 = inlined_call_operand.vmem [shape: f32[32,8], index: 5, kind: input, shape index: {}]
  %s6 = inlined_call_operand.vmem [shape: f32[1,8], index: 6, kind: input, shape index: {}]
  %s7 = inlined_call_operand.vmem [shape: f32[1024,8], index: 7, kind: output, shape index: {}]
  %s8 = sld [smem:[#allocation0]]
  $region61: #{edge_regression_head.1} parent=0
    _
  %s10 = ssub.s32 1, %s8
  %s11 = scalar_select 0, %s10, %s8
  loop: start=0, step=1, limit=4
  $region2: #{edge_regression_head.1} parent=0 // loop_pre_header
    _
  $region3: #{edge_regression_head.1} parent=0 // loop_header
    %s13 = sphi 0, %s17
    %p14 = scmp.ge.s32.totalorder %s13, 4
    %s23 = sphi 0, %s25
    %s26 = sphi 0, %s23
    %s27 = sphi 0, %s26
    %s43 = sphi 0, %s27
    %s49 = sphi 0, %s51
    %s52 = sphi 0, %s49
    %s53 = sphi 0, %s52
    %s69 = sphi 0, %s53
    %s73 = sphi 0, %s73
    %s75 = sphi 0, %s73
    %s76 = sphi 0, %s75
    %s90 = sphi 0, %s76
    %s94 = sphi 0, %s94
    %s96 = sphi 0, %s94
    %s97 = sphi 0, %s96
    %s111 = sphi 0, %s97
    %s115 = sphi 0, %s115
    %s117 = sphi 0, %s115
    %s118 = sphi 0, %s117
    %s132 = sphi 0, %s118
    %s136 = sphi 0, %s136
    %s138 = sphi 0, %s136
    %s139 = sphi 0, %s138
    %s153 = sphi 0, %s139
    %s157 = sphi 0, %s157
    %s159 = sphi 0, %s157
    %s160 = sphi 0, %s159
    %s174 = sphi 0, %s160
    %s180 = sphi 0, %s182
    %s183 = sphi 0, %s180
    %s184 = sphi 0, %s183
    %s200 = sphi 0, %s184
  $region4: #{edge_regression_head.1} parent=0 // loop_header_branch
    %16 = sbr.rel (%p14) target = $region8
  $region5: #{edge_regression_head.1} parent=0 // loop_body
    %s18 = ssub.s32 %s13, 1
    %s19 = ssub.s32 %s13, 2
    %s20 = sadd.s32 %s13, 1
    %s21 = ssub.s32 %s13, %s20
    %p22 = scmp.eq.s32.totalorder %s21, 0
    %s24 = sadd.s32 %s23, 1
    %s25 = scalar_select %p22, %s23, %s24
    %p28 = pneg %p22
    %p29 = scmp.eq.s32.totalorder %s13, 1
    %p30 = por %p28, %p29
    %p31 = scmp.ne.s32.totalorder %s23, %s26
    %p32 = scmp.eq.s32.totalorder %s13, 0
    %p33 = por %p31, %p32
    %p34 = scmp.ne.s32.totalorder %s23, %s26
    %p35 = scmp.eq.s32.totalorder %s18, 1
    %p36 = por %p34, %p35
    %p37 = scmp.ne.s32.totalorder %s26, %s27
    %p38 = scmp.eq.s32.totalorder %s18, 0
    %p39 = por %p37, %p38
    %p40 = scmp.ne.s32.totalorder %s26, %s27
    %p41 = scmp.eq.s32.totalorder %s19, 1
    %p42 = por %p40, %p41
    %p44 = scmp.ne.s32.totalorder %s27, %s43
    %p45 = scmp.eq.s32.totalorder %s19, 0
    %p46 = por %p44, %p45
    %s47 = ssub.s32 %s13, %s20
    %p48 = scmp.eq.s32.totalorder %s47, 0
    %s50 = sadd.s32 %s49, 1
    %s51 = scalar_select %p48, %s49, %s50
    %p54 = pneg %p48
    %p55 = scmp.eq.s32.totalorder %s13, 1
    %p56 = por %p54, %p55
    %p57 = scmp.ne.s32.totalorder %s49, %s52
    %p58 = scmp.eq.s32.totalorder %s13, 0
    %p59 = por %p57, %p58
    %p60 = scmp.ne.s32.totalorder %s49, %s52
    %p61 = scmp.eq.s32.totalorder %s18, 1
    %p62 = por %p60, %p61
    %p63 = scmp.ne.s32.totalorder %s52, %s53
    %p64 = scmp.eq.s32.totalorder %s18, 0
    %p65 = por %p63, %p64
    %p66 = scmp.ne.s32.totalorder %s52, %s53
    %p67 = scmp.eq.s32.totalorder %s19, 1
    %p68 = por %p66, %p67
    %p70 = scmp.ne.s32.totalorder %s53, %s69
    %p71 = scmp.eq.s32.totalorder %s19, 0
    %p72 = por %p70, %p71
    %s74 = sadd.s32 %s73, 1
    %p77 = scmp.eq.s32.totalorder %s13, 1
    %p78 = scmp.ne.s32.totalorder %s73, %s75
    %p79 = scmp.eq.s32.totalorder %s13, 0
    %p80 = por %p78, %p79
    %p81 = scmp.ne.s32.totalorder %s73, %s75
    %p82 = scmp.eq.s32.totalorder %s18, 1
    %p83 = por %p81, %p82
    %p84 = scmp.ne.s32.totalorder %s75, %s76
    %p85 = scmp.eq.s32.totalorder %s18, 0
    %p86 = por %p84, %p85
    %p87 = scmp.ne.s32.totalorder %s75, %s76
    %p88 = scmp.eq.s32.totalorder %s19, 1
    %p89 = por %p87, %p88
    %p91 = scmp.ne.s32.totalorder %s76, %s90
    %p92 = scmp.eq.s32.totalorder %s19, 0
    %p93 = por %p91, %p92
    %s95 = sadd.s32 %s94, 1
    %p98 = scmp.eq.s32.totalorder %s13, 1
    %p99 = scmp.ne.s32.totalorder %s94, %s96
    %p100 = scmp.eq.s32.totalorder %s13, 0
    %p101 = por %p99, %p100
    %p102 = scmp.ne.s32.totalorder %s94, %s96
    %p103 = scmp.eq.s32.totalorder %s18, 1
    %p104 = por %p102, %p103
    %p105 = scmp.ne.s32.totalorder %s96, %s97
    %p106 = scmp.eq.s32.totalorder %s18, 0
    %p107 = por %p105, %p106
    %p108 = scmp.ne.s32.totalorder %s96, %s97
    %p109 = scmp.eq.s32.totalorder %s19, 1
    %p110 = por %p108, %p109
    %p112 = scmp.ne.s32.totalorder %s97, %s111
    %p113 = scmp.eq.s32.totalorder %s19, 0
    %p114 = por %p112, %p113
    %s116 = sadd.s32 %s115, 1
    %p119 = scmp.eq.s32.totalorder %s13, 1
    %p120 = scmp.ne.s32.totalorder %s115, %s117
    %p121 = scmp.eq.s32.totalorder %s13, 0
    %p122 = por %p120, %p121
    %p123 = scmp.ne.s32.totalorder %s115, %s117
    %p124 = scmp.eq.s32.totalorder %s18, 1
    %p125 = por %p123, %p124
    %p126 = scmp.ne.s32.totalorder %s117, %s118
    %p127 = scmp.eq.s32.totalorder %s18, 0
    %p128 = por %p126, %p127
    %p129 = scmp.ne.s32.totalorder %s117, %s118
    %p130 = scmp.eq.s32.totalorder %s19, 1
    %p131 = por %p129, %p130
    %p133 = scmp.ne.s32.totalorder %s118, %s132
    %p134 = scmp.eq.s32.totalorder %s19, 0
    %p135 = por %p133, %p134
    %s137 = sadd.s32 %s136, 1
    %p140 = scmp.eq.s32.totalorder %s13, 1
    %p141 = scmp.ne.s32.totalorder %s136, %s138
    %p142 = scmp.eq.s32.totalorder %s13, 0
    %p143 = por %p141, %p142
    %p144 = scmp.ne.s32.totalorder %s136, %s138
    %p145 = scmp.eq.s32.totalorder %s18, 1
    %p146 = por %p144, %p145
    %p147 = scmp.ne.s32.totalorder %s138, %s139
    %p148 = scmp.eq.s32.totalorder %s18, 0
    %p149 = por %p147, %p148
    %p150 = scmp.ne.s32.totalorder %s138, %s139
    %p151 = scmp.eq.s32.totalorder %s19, 1
    %p152 = por %p150, %p151
    %p154 = scmp.ne.s32.totalorder %s139, %s153
    %p155 = scmp.eq.s32.totalorder %s19, 0
    %p156 = por %p154, %p155
    %s158 = sadd.s32 %s157, 1
    %p161 = scmp.eq.s32.totalorder %s13, 1
    %p162 = scmp.ne.s32.totalorder %s157, %s159
    %p163 = scmp.eq.s32.totalorder %s13, 0
    %p164 = por %p162, %p163
    %p165 = scmp.ne.s32.totalorder %s157, %s159
    %p166 = scmp.eq.s32.totalorder %s18, 1
    %p167 = por %p165, %p166
    %p168 = scmp.ne.s32.totalorder %s159, %s160
    %p169 = scmp.eq.s32.totalorder %s18, 0
    %p170 = por %p168, %p169
    %p171 = scmp.ne.s32.totalorder %s159, %s160
    %p172 = scmp.eq.s32.totalorder %s19, 1
    %p173 = por %p171, %p172
    %p175 = scmp.ne.s32.totalorder %s160, %s174
    %p176 = scmp.eq.s32.totalorder %s19, 0
    %p177 = por %p175, %p176
    %s178 = ssub.s32 %s13, %s20
    %p179 = scmp.eq.s32.totalorder %s178, 0
    %s181 = sadd.s32 %s180, 1
    %s182 = scalar_select %p179, %s180, %s181
    %p185 = pneg %p179
    %p186 = scmp.eq.s32.totalorder %s13, 1
    %p187 = por %p185, %p186
    %p188 = scmp.ne.s32.totalorder %s180, %s183
    %p189 = scmp.eq.s32.totalorder %s13, 0
    %p190 = por %p188, %p189
    %p191 = scmp.ne.s32.totalorder %s180, %s183
    %p192 = scmp.eq.s32.totalorder %s18, 1
    %p193 = por %p191, %p192
    %p194 = scmp.ne.s32.totalorder %s183, %s184
    %p195 = scmp.eq.s32.totalorder %s18, 0
    %p196 = por %p194, %p195
    %p197 = scmp.ne.s32.totalorder %s183, %s184
    %p198 = scmp.eq.s32.totalorder %s19, 1
    %p199 = por %p197, %p198
    %p201 = scmp.ne.s32.totalorder %s184, %s200
    %p202 = scmp.eq.s32.totalorder %s19, 0
    %p203 = por %p201, %p202
    %p204 = scmp.le.s32.totalorder 1, %s13
    %p205 = scmp.lt.s32.totalorder %s13, 3
    %p206 = pnand %p204, %p205
    %p207 = pneg %p206
    // Predicated region
    $region9: #{edge_regression_head.1} parent=5 // pred_check
      _
    $region10: #{edge_regression_head.1} parent=5 // pred_check_branch
      %209 = sbr.rel (%p206) target = $region12
    $region11: #{edge_regression_head.1} parent=5 // pred_region
      %s210 = ssub.s32 %s13, 1
      // Predicated region
      $region13: #{edge_regression_head.1} parent=11 // pred_check
        %p211 = pneg %p86
      $region14: #{edge_regression_head.1} parent=11 // pred_check_branch
        %213 = sbr.rel (%p211) target = $region16
      $region15: #{edge_regression_head.1} parent=11 // pred_region
        _
      $region16: #{edge_regression_head.1} parent=11 // pred_fallthru
        _
      // Predicated region
      $region17: #{edge_regression_head.1} parent=11 // pred_check
        %p214 = pneg %p107
      $region18: #{edge_regression_head.1} parent=11 // pred_check_branch
        %216 = sbr.rel (%p214) target = $region20
      $region19: #{edge_regression_head.1} parent=11 // pred_region
        _
      $region20: #{edge_regression_head.1} parent=11 // pred_fallthru
        _
      // Predicated region
      $region21: #{edge_regression_head.1} parent=11 // pred_check
        %p217 = pneg %p128
      $region22: #{edge_regression_head.1} parent=11 // pred_check_branch
        %219 = sbr.rel (%p217) target = $region24
      $region23: #{edge_regression_head.1} parent=11 // pred_region
        _
      $region24: #{edge_regression_head.1} parent=11 // pred_fallthru
        _
      // Predicated region
      $region25: #{edge_regression_head.1} parent=11 // pred_check
        %p220 = pneg %p149
      $region26: #{edge_regression_head.1} parent=11 // pred_check_branch
        %222 = sbr.rel (%p220) target = $region28
      $region27: #{edge_regression_head.1} parent=11 // pred_region
        _
      $region28: #{edge_regression_head.1} parent=11 // pred_fallthru
        _
      // Predicated region
      $region29: #{edge_regression_head.1} parent=11 // pred_check
        %p223 = pneg %p170
      $region30: #{edge_regression_head.1} parent=11 // pred_check_branch
        %225 = sbr.rel (%p223) target = $region32
      $region31: #{edge_regression_head.1} parent=11 // pred_region
        _
      $region32: #{edge_regression_head.1} parent=11 // pred_fallthru
        _
    $region12: #{edge_regression_head.1} parent=5 // pred_fallthru
      _
    %p226 = scmp.lt.s32.totalorder %s13, 2
    // Predicated region
    $region33: #{edge_regression_head.1} parent=5 // pred_check
      %p227 = pneg %p226
    $region34: #{edge_regression_head.1} parent=5 // pred_check_branch
      %229 = sbr.rel (%p227) target = $region36
    $region35: #{edge_regression_head.1} parent=5 // pred_region
      // Predicated region
      $region37: #{edge_regression_head.1} parent=35 // pred_check
        %p230 = pneg %p33
      $region38: #{edge_regression_head.1} parent=35 // pred_check_branch
        %232 = sbr.rel (%p230) target = $region40
      $region39: #{edge_regression_head.1} parent=35 // pred_region
        %s233 = smul.u32 64, %s13
        %p234 = scmp.lt.s32.totalorder %s233, 127
        %s235 = scalar_select %p234, %s233, 127
        %s236 = smul.addr %s235, 8
        %s237 = scalar_lea.vmem %s0, %s236
        %s238 = smul.u32 64, %s13
      $region40: #{edge_regression_head.1} parent=35 // pred_fallthru
        _
      // Predicated region
      $region41: #{edge_regression_head.1} parent=35 // pred_check
        %p239 = pneg %p59
      $region42: #{edge_regression_head.1} parent=35 // pred_check_branch
        %241 = sbr.rel (%p239) target = $region44
      $region43: #{edge_regression_head.1} parent=35 // pred_region
        %s242 = smul.u32 64, %s13
        %p243 = scmp.lt.s32.totalorder %s242, 127
        %s244 = scalar_select %p243, %s242, 127
        %s245 = smul.addr %s244, 8
        %s246 = scalar_lea.vmem %s1, %s245
        %s247 = smul.u32 64, %s13
      $region44: #{edge_regression_head.1} parent=35 // pred_fallthru
        _
    $region36: #{edge_regression_head.1} parent=5 // pred_fallthru
      _
    %p248 = scmp.le.s32.totalorder 1, %s13
    %p249 = scmp.lt.s32.totalorder %s13, 3
    %p250 = pnand %p248, %p249
    %p251 = pneg %p250
    // Predicated region
    $region45: #{edge_regression_head.1} parent=5 // pred_check
      _
    $region46: #{edge_regression_head.1} parent=5 // pred_check_branch
      %253 = sbr.rel (%p250) target = $region48
    $region47: #{edge_regression_head.1} parent=5 // pred_region
      %s254 = ssub.s32 %s13, 1
      %s255 = smul.u32 64, %s18
      %p256 = scmp.lt.s32.totalorder %s255, 127
      %s257 = scalar_select %p256, %s255, 127
      %s258 = smul.addr %s257, 8
      %s259 = scalar_lea.vmem %s0, %s258
      %p260 = pneg %p39
      %p261 = pneg %p36
      %s262 = smul.u32 64, %s18
      %p263 = scmp.lt.s32.totalorder %s262, 127
      %s264 = scalar_select %p263, %s262, 127
      %s265 = smul.addr %s264, 8
      %s266 = scalar_lea.vmem %s1, %s265
      %p267 = pneg %p65
      %p268 = pneg %p62
      %p269 = pneg %p86
      %p270 = pneg %p83
      %p271 = pneg %p107
      %p272 = pneg %p104
      %p273 = pneg %p128
      %p274 = pneg %p125
      %p275 = pneg %p149
      %p276 = pneg %p146
      %p277 = pneg %p170
      %p278 = pneg %p167
      %p279 = pneg %p196
      %p280 = pneg %p193
      %s281 = smul.u32 64, %s18
      %p282 = scmp.lt.s32.totalorder %s281, 127
      %s283 = scalar_select %p282, %s281, 127
      %s284 = smul.addr %s283, 8
      %s285 = scalar_lea.vmem %s7, %s284
      %s286 = smul.u32 64, %s18
      %p287 = scmp.lt.s32.totalorder %s286, 127
      %s288 = scalar_select %p287, %s286, 127
      %s289 = smul.addr %s288, 8
      %s290 = scalar_lea.vmem %s0, %s289
      %s291 = smul.u32 64, %s18
      %s292 = smul.u32 64, %s18
      %p293 = scmp.lt.s32.totalorder %s292, 127
      %s294 = scalar_select %p293, %s292, 127
      %s295 = smul.addr %s294, 8
      %s296 = scalar_lea.vmem %s1, %s295
      %s297 = smul.u32 64, %s18
      %s298 = smul.u32 64, %s18
      %p299 = scmp.lt.s32.totalorder %s298, 127
      %s300 = scalar_select %p299, %s298, 127
      %s301 = smul.addr %s300, 8
      %s302 = scalar_lea.vmem %s7, %s301
      %s303 = smul.u32 64, %s18
      %v304 = vlaneseq
      %v305 = vand.u32 %v304, 127
      %v306 = vld [vmem:[%s290] sm:$0xff]
      %v307 = vld [vmem:[%s290 + $0x8] sm:$0xff]
      %v308 = vld [vmem:[%s290 + $0x10] sm:$0xff]
      %v309 = vld [vmem:[%s290 + $0x18] sm:$0xff]
      %v310 = vld [vmem:[%s290 + $0x20] sm:$0xff]
      %v311 = vld [vmem:[%s290 + $0x28] sm:$0xff]
      %v312 = vld [vmem:[%s290 + $0x30] sm:$0xff]
      %v313 = vld [vmem:[%s290 + $0x38] sm:$0xff]
      %v314 = vld [vmem:[%s290 + $0x40] sm:$0xff]
      %v315 = vld [vmem:[%s290 + $0x48] sm:$0xff]
      %v316 = vld [vmem:[%s290 + $0x50] sm:$0xff]
      %v317 = vld [vmem:[%s290 + $0x58] sm:$0xff]
      %v318 = vld [vmem:[%s290 + $0x60] sm:$0xff]
      %v319 = vld [vmem:[%s290 + $0x68] sm:$0xff]
      %v320 = vld [vmem:[%s290 + $0x70] sm:$0xff]
      %v321 = vld [vmem:[%s290 + $0x78] sm:$0xff]
      %v322 = vld [vmem:[%s290 + $0x80] sm:$0xff]
      %v323 = vld [vmem:[%s290 + $0x88] sm:$0xff]
      %v324 = vld [vmem:[%s290 + $0x90] sm:$0xff]
      %v325 = vld [vmem:[%s290 + $0x98] sm:$0xff]
      %v326 = vld [vmem:[%s290 + $0xa0] sm:$0xff]
      %v327 = vld [vmem:[%s290 + $0xa8] sm:$0xff]
      %v328 = vld [vmem:[%s290 + $0xb0] sm:$0xff]
      %v329 = vld [vmem:[%s290 + $0xb8] sm:$0xff]
      %v330 = vld [vmem:[%s290 + $0xc0] sm:$0xff]
      %v331 = vld [vmem:[%s290 + $0xc8] sm:$0xff]
      %v332 = vld [vmem:[%s290 + $0xd0] sm:$0xff]
      %v333 = vld [vmem:[%s290 + $0xd8] sm:$0xff]
      %v334 = vld [vmem:[%s290 + $0xe0] sm:$0xff]
      %v335 = vld [vmem:[%s290 + $0xe8] sm:$0xff]
      %v336 = vld [vmem:[%s290 + $0xf0] sm:$0xff]
      %v337 = vld [vmem:[%s290 + $0xf8] sm:$0xff]
      %v338 = vld [vmem:[%s290 + $0x100] sm:$0xff]
      %v339 = vld [vmem:[%s290 + $0x108] sm:$0xff]
      %v340 = vld [vmem:[%s290 + $0x110] sm:$0xff]
      %v341 = vld [vmem:[%s290 + $0x118] sm:$0xff]
      %v342 = vld [vmem:[%s290 + $0x120] sm:$0xff]
      %v343 = vld [vmem:[%s290 + $0x128] sm:$0xff]
      %v344 = vld [vmem:[%s290 + $0x130] sm:$0xff]
      %v345 = vld [vmem:[%s290 + $0x138] sm:$0xff]
      %v346 = vld [vmem:[%s290 + $0x140] sm:$0xff]
      %v347 = vld [vmem:[%s290 + $0x148] sm:$0xff]
      %v348 = vld [vmem:[%s290 + $0x150] sm:$0xff]
      %v349 = vld [vmem:[%s290 + $0x158] sm:$0xff]
      %v350 = vld [vmem:[%s290 + $0x160] sm:$0xff]
      %v351 = vld [vmem:[%s290 + $0x168] sm:$0xff]
      %v352 = vld [vmem:[%s290 + $0x170] sm:$0xff]
      %v353 = vld [vmem:[%s290 + $0x178] sm:$0xff]
      %v354 = vld [vmem:[%s290 + $0x180] sm:$0xff]
      %v355 = vld [vmem:[%s290 + $0x188] sm:$0xff]
      %v356 = vld [vmem:[%s290 + $0x190] sm:$0xff]
      %v357 = vld [vmem:[%s290 + $0x198] sm:$0xff]
      %v358 = vld [vmem:[%s290 + $0x1a0] sm:$0xff]
      %v359 = vld [vmem:[%s290 + $0x1a8] sm:$0xff]
      %v360 = vld [vmem:[%s290 + $0x1b0] sm:$0xff]
      %v361 = vld [vmem:[%s290 + $0x1b8] sm:$0xff]
      %v362 = vld [vmem:[%s290 + $0x1c0] sm:$0xff]
      %v363 = vld [vmem:[%s290 + $0x1c8] sm:$0xff]
      %v364 = vld [vmem:[%s290 + $0x1d0] sm:$0xff]
      %v365 = vld [vmem:[%s290 + $0x1d8] sm:$0xff]
      %v366 = vld [vmem:[%s290 + $0x1e0] sm:$0xff]
      %v367 = vld [vmem:[%s290 + $0x1e8] sm:$0xff]
      %v368 = vld [vmem:[%s290 + $0x1f0] sm:$0xff]
      %v369 = vld [vmem:[%s290 + $0x1f8] sm:$0xff]
      %370 = vset.pattern.permute.xlu0 0
      %371 = vperm.xlu0 %370, %v306
      %v372 = vpop.permute.xlu0 %371
      %373 = vset.pattern.permute.xlu0 0
      %374 = vperm.xlu0 %373, %v307
      %v375 = vpop.permute.xlu0 %374
      %376 = vset.pattern.permute.xlu0 0
      %377 = vperm.xlu0 %376, %v308
      %v378 = vpop.permute.xlu0 %377
      %379 = vset.pattern.permute.xlu0 0
      %380 = vperm.xlu0 %379, %v309
      %v381 = vpop.permute.xlu0 %380
      %382 = vset.pattern.permute.xlu0 0
      %383 = vperm.xlu0 %382, %v310
      %v384 = vpop.permute.xlu0 %383
      %385 = vset.pattern.permute.xlu0 0
      %386 = vperm.xlu0 %385, %v311
      %v387 = vpop.permute.xlu0 %386
      %388 = vset.pattern.permute.xlu0 0
      %389 = vperm.xlu0 %388, %v312
      %v390 = vpop.permute.xlu0 %389
      %391 = vset.pattern.permute.xlu0 0
      %392 = vperm.xlu0 %391, %v313
      %v393 = vpop.permute.xlu0 %392
      %394 = vset.pattern.permute.xlu0 0
      %395 = vperm.xlu0 %394, %v314
      %v396 = vpop.permute.xlu0 %395
      %397 = vset.pattern.permute.xlu0 0
      %398 = vperm.xlu0 %397, %v315
      %v399 = vpop.permute.xlu0 %398
      %400 = vset.pattern.permute.xlu0 0
      %401 = vperm.xlu0 %400, %v316
      %v402 = vpop.permute.xlu0 %401
      %403 = vset.pattern.permute.xlu0 0
      %404 = vperm.xlu0 %403, %v317
      %v405 = vpop.permute.xlu0 %404
      %406 = vset.pattern.permute.xlu0 0
      %407 = vperm.xlu0 %406, %v318
      %v408 = vpop.permute.xlu0 %407
      %409 = vset.pattern.permute.xlu0 0
      %410 = vperm.xlu0 %409, %v319
      %v411 = vpop.permute.xlu0 %410
      %412 = vset.pattern.permute.xlu0 0
      %413 = vperm.xlu0 %412, %v320
      %v414 = vpop.permute.xlu0 %413
      %415 = vset.pattern.permute.xlu0 0
      %416 = vperm.xlu0 %415, %v321
      %v417 = vpop.permute.xlu0 %416
      %418 = vset.pattern.permute.xlu0 0
      %419 = vperm.xlu0 %418, %v322
      %v420 = vpop.permute.xlu0 %419
      %421 = vset.pattern.permute.xlu0 0
      %422 = vperm.xlu0 %421, %v323
      %v423 = vpop.permute.xlu0 %422
      %424 = vset.pattern.permute.xlu0 0
      %425 = vperm.xlu0 %424, %v324
      %v426 = vpop.permute.xlu0 %425
      %427 = vset.pattern.permute.xlu0 0
      %428 = vperm.xlu0 %427, %v325
      %v429 = vpop.permute.xlu0 %428
      %430 = vset.pattern.permute.xlu0 0
      %431 = vperm.xlu0 %430, %v326
      %v432 = vpop.permute.xlu0 %431
      %433 = vset.pattern.permute.xlu0 0
      %434 = vperm.xlu0 %433, %v327
      %v435 = vpop.permute.xlu0 %434
      %436 = vset.pattern.permute.xlu0 0
      %437 = vperm.xlu0 %436, %v328
      %v438 = vpop.permute.xlu0 %437
      %439 = vset.pattern.permute.xlu0 0
      %440 = vperm.xlu0 %439, %v329
      %v441 = vpop.permute.xlu0 %440
      %442 = vset.pattern.permute.xlu0 0
      %443 = vperm.xlu0 %442, %v330
      %v444 = vpop.permute.xlu0 %443
      %445 = vset.pattern.permute.xlu0 0
      %446 = vperm.xlu0 %445, %v331
      %v447 = vpop.permute.xlu0 %446
      %448 = vset.pattern.permute.xlu0 0
      %449 = vperm.xlu0 %448, %v332
      %v450 = vpop.permute.xlu0 %449
      %451 = vset.pattern.permute.xlu0 0
      %452 = vperm.xlu0 %451, %v333
      %v453 = vpop.permute.xlu0 %452
      %454 = vset.pattern.permute.xlu0 0
      %455 = vperm.xlu0 %454, %v334
      %v456 = vpop.permute.xlu0 %455
      %457 = vset.pattern.permute.xlu0 0
      %458 = vperm.xlu0 %457, %v335
      %v459 = vpop.permute.xlu0 %458
      %460 = vset.pattern.permute.xlu0 0
      %461 = vperm.xlu0 %460, %v336
      %v462 = vpop.permute.xlu0 %461
      %463 = vset.pattern.permute.xlu0 0
      %464 = vperm.xlu0 %463, %v337
      %v465 = vpop.permute.xlu0 %464
      %466 = vset.pattern.permute.xlu0 0
      %467 = vperm.xlu0 %466, %v338
      %v468 = vpop.permute.xlu0 %467
      %469 = vset.pattern.permute.xlu0 0
      %470 = vperm.xlu0 %469, %v339
      %v471 = vpop.permute.xlu0 %470
      %472 = vset.pattern.permute.xlu0 0
      %473 = vperm.xlu0 %472, %v340
      %v474 = vpop.permute.xlu0 %473
      %475 = vset.pattern.permute.xlu0 0
      %476 = vperm.xlu0 %475, %v341
      %v477 = vpop.permute.xlu0 %476
      %478 = vset.pattern.permute.xlu0 0
      %479 = vperm.xlu0 %478, %v342
      %v480 = vpop.permute.xlu0 %479
      %481 = vset.pattern.permute.xlu0 0
      %482 = vperm.xlu0 %481, %v343
      %v483 = vpop.permute.xlu0 %482
      %484 = vset.pattern.permute.xlu0 0
      %485 = vperm.xlu0 %484, %v344
      %v486 = vpop.permute.xlu0 %485
      %487 = vset.pattern.permute.xlu0 0
      %488 = vperm.xlu0 %487, %v345
      %v489 = vpop.permute.xlu0 %488
      %490 = vset.pattern.permute.xlu0 0
      %491 = vperm.xlu0 %490, %v346
      %v492 = vpop.permute.xlu0 %491
      %493 = vset.pattern.permute.xlu0 0
      %494 = vperm.xlu0 %493, %v347
      %v495 = vpop.permute.xlu0 %494
      %496 = vset.pattern.permute.xlu0 0
      %497 = vperm.xlu0 %496, %v348
      %v498 = vpop.permute.xlu0 %497
      %499 = vset.pattern.permute.xlu0 0
      %500 = vperm.xlu0 %499, %v349
      %v501 = vpop.permute.xlu0 %500
      %502 = vset.pattern.permute.xlu0 0
      %503 = vperm.xlu0 %502, %v350
      %v504 = vpop.permute.xlu0 %503
      %505 = vset.pattern.permute.xlu0 0
      %506 = vperm.xlu0 %505, %v351
      %v507 = vpop.permute.xlu0 %506
      %508 = vset.pattern.permute.xlu0 0
      %509 = vperm.xlu0 %508, %v352
      %v510 = vpop.permute.xlu0 %509
      %511 = vset.pattern.permute.xlu0 0
      %512 = vperm.xlu0 %511, %v353
      %v513 = vpop.permute.xlu0 %512
      %514 = vset.pattern.permute.xlu0 0
      %515 = vperm.xlu0 %514, %v354
      %v516 = vpop.permute.xlu0 %515
      %517 = vset.pattern.permute.xlu0 0
      %518 = vperm.xlu0 %517, %v355
      %v519 = vpop.permute.xlu0 %518
      %520 = vset.pattern.permute.xlu0 0
      %521 = vperm.xlu0 %520, %v356
      %v522 = vpop.permute.xlu0 %521
      %523 = vset.pattern.permute.xlu0 0
      %524 = vperm.xlu0 %523, %v357
      %v525 = vpop.permute.xlu0 %524
      %526 = vset.pattern.permute.xlu0 0
      %527 = vperm.xlu0 %526, %v358
      %v528 = vpop.permute.xlu0 %527
      %529 = vset.pattern.permute.xlu0 0
      %530 = vperm.xlu0 %529, %v359
      %v531 = vpop.permute.xlu0 %530
      %532 = vset.pattern.permute.xlu0 0
      %533 = vperm.xlu0 %532, %v360
      %v534 = vpop.permute.xlu0 %533
      %535 = vset.pattern.permute.xlu0 0
      %536 = vperm.xlu0 %535, %v361
      %v537 = vpop.permute.xlu0 %536
      %538 = vset.pattern.permute.xlu0 0
      %539 = vperm.xlu0 %538, %v362
      %v540 = vpop.permute.xlu0 %539
      %541 = vset.pattern.permute.xlu0 0
      %542 = vperm.xlu0 %541, %v363
      %v543 = vpop.permute.xlu0 %542
      %544 = vset.pattern.permute.xlu0 0
      %545 = vperm.xlu0 %544, %v364
      %v546 = vpop.permute.xlu0 %545
      %547 = vset.pattern.permute.xlu0 0
      %548 = vperm.xlu0 %547, %v365
      %v549 = vpop.permute.xlu0 %548
      %550 = vset.pattern.permute.xlu0 0
      %551 = vperm.xlu0 %550, %v366
      %v552 = vpop.permute.xlu0 %551
      %553 = vset.pattern.permute.xlu0 0
      %554 = vperm.xlu0 %553, %v367
      %v555 = vpop.permute.xlu0 %554
      %556 = vset.pattern.permute.xlu0 0
      %557 = vperm.xlu0 %556, %v368
      %v558 = vpop.permute.xlu0 %557
      %559 = vset.pattern.permute.xlu0 0
      %560 = vperm.xlu0 %559, %v369
      %v561 = vpop.permute.xlu0 %560
      %vm562 = vcmp.eq.s32.totalorder %v372, %v305
      %vm563 = vcmp.eq.s32.totalorder %v375, %v305
      %vm564 = vcmp.eq.s32.totalorder %v378, %v305
      %vm565 = vcmp.eq.s32.totalorder %v381, %v305
      %vm566 = vcmp.eq.s32.totalorder %v384, %v305
      %vm567 = vcmp.eq.s32.totalorder %v387, %v305
      %vm568 = vcmp.eq.s32.totalorder %v390, %v305
      %vm569 = vcmp.eq.s32.totalorder %v393, %v305
      %vm570 = vcmp.eq.s32.totalorder %v396, %v305
      %vm571 = vcmp.eq.s32.totalorder %v399, %v305
      %vm572 = vcmp.eq.s32.totalorder %v402, %v305
      %vm573 = vcmp.eq.s32.totalorder %v405, %v305
      %vm574 = vcmp.eq.s32.totalorder %v408, %v305
      %vm575 = vcmp.eq.s32.totalorder %v411, %v305
      %vm576 = vcmp.eq.s32.totalorder %v414, %v305
      %vm577 = vcmp.eq.s32.totalorder %v417, %v305
      %vm578 = vcmp.eq.s32.totalorder %v420, %v305
      %vm579 = vcmp.eq.s32.totalorder %v423, %v305
      %vm580 = vcmp.eq.s32.totalorder %v426, %v305
      %vm581 = vcmp.eq.s32.totalorder %v429, %v305
      %vm582 = vcmp.eq.s32.totalorder %v432, %v305
      %vm583 = vcmp.eq.s32.totalorder %v435, %v305
      %vm584 = vcmp.eq.s32.totalorder %v438, %v305
      %vm585 = vcmp.eq.s32.totalorder %v441, %v305
      %vm586 = vcmp.eq.s32.totalorder %v444, %v305
      %vm587 = vcmp.eq.s32.totalorder %v447, %v305
      %vm588 = vcmp.eq.s32.totalorder %v450, %v305
      %vm589 = vcmp.eq.s32.totalorder %v453, %v305
      %vm590 = vcmp.eq.s32.totalorder %v456, %v305
      %vm591 = vcmp.eq.s32.totalorder %v459, %v305
      %vm592 = vcmp.eq.s32.totalorder %v462, %v305
      %vm593 = vcmp.eq.s32.totalorder %v465, %v305
      %vm594 = vcmp.eq.s32.totalorder %v468, %v305
      %vm595 = vcmp.eq.s32.totalorder %v471, %v305
      %vm596 = vcmp.eq.s32.totalorder %v474, %v305
      %vm597 = vcmp.eq.s32.totalorder %v477, %v305
      %vm598 = vcmp.eq.s32.totalorder %v480, %v305
      %vm599 = vcmp.eq.s32.totalorder %v483, %v305
      %vm600 = vcmp.eq.s32.totalorder %v486, %v305
      %vm601 = vcmp.eq.s32.totalorder %v489, %v305
      %vm602 = vcmp.eq.s32.totalorder %v492, %v305
      %vm603 = vcmp.eq.s32.totalorder %v495, %v305
      %vm604 = vcmp.eq.s32.totalorder %v498, %v305
      %vm605 = vcmp.eq.s32.totalorder %v501, %v305
      %vm606 = vcmp.eq.s32.totalorder %v504, %v305
      %vm607 = vcmp.eq.s32.totalorder %v507, %v305
      %vm608 = vcmp.eq.s32.totalorder %v510, %v305
      %vm609 = vcmp.eq.s32.totalorder %v513, %v305
      %vm610 = vcmp.eq.s32.totalorder %v516, %v305
      %vm611 = vcmp.eq.s32.totalorder %v519, %v305
      %vm612 = vcmp.eq.s32.totalorder %v522, %v305
      %vm613 = vcmp.eq.s32.totalorder %v525, %v305
      %vm614 = vcmp.eq.s32.totalorder %v528, %v305
      %vm615 = vcmp.eq.s32.totalorder %v531, %v305
      %vm616 = vcmp.eq.s32.totalorder %v534, %v305
      %vm617 = vcmp.eq.s32.totalorder %v537, %v305
      %vm618 = vcmp.eq.s32.totalorder %v540, %v305
      %vm619 = vcmp.eq.s32.totalorder %v543, %v305
      %vm620 = vcmp.eq.s32.totalorder %v546, %v305
      %vm621 = vcmp.eq.s32.totalorder %v549, %v305
      %vm622 = vcmp.eq.s32.totalorder %v552, %v305
      %vm623 = vcmp.eq.s32.totalorder %v555, %v305
      %vm624 = vcmp.eq.s32.totalorder %v558, %v305
      %vm625 = vcmp.eq.s32.totalorder %v561, %v305
      %v626 = vsel %vm562, 1.0, 0.0
      %v627 = vsel %vm563, 1.0, 0.0
      %v628 = vsel %vm564, 1.0, 0.0
      %v629 = vsel %vm565, 1.0, 0.0
      %v630 = vsel %vm566, 1.0, 0.0
      %v631 = vsel %vm567, 1.0, 0.0
      %v632 = vsel %vm568, 1.0, 0.0
      %v633 = vsel %vm569, 1.0, 0.0
      %v634 = vsel %vm570, 1.0, 0.0
      %v635 = vsel %vm571, 1.0, 0.0
      %v636 = vsel %vm572, 1.0, 0.0
      %v637 = vsel %vm573, 1.0, 0.0
      %v638 = vsel %vm574, 1.0, 0.0
      %v639 = vsel %vm575, 1.0, 0.0
      %v640 = vsel %vm576, 1.0, 0.0
      %v641 = vsel %vm577, 1.0, 0.0
      %v642 = vsel %vm578, 1.0, 0.0
      %v643 = vsel %vm579, 1.0, 0.0
      %v644 = vsel %vm580, 1.0, 0.0
      %v645 = vsel %vm581, 1.0, 0.0
      %v646 = vsel %vm582, 1.0, 0.0
      %v647 = vsel %vm583, 1.0, 0.0
      %v648 = vsel %vm584, 1.0, 0.0
      %v649 = vsel %vm585, 1.0, 0.0
      %v650 = vsel %vm586, 1.0, 0.0
      %v651 = vsel %vm587, 1.0, 0.0
      %v652 = vsel %vm588, 1.0, 0.0
      %v653 = vsel %vm589, 1.0, 0.0
      %v654 = vsel %vm590, 1.0, 0.0
      %v655 = vsel %vm591, 1.0, 0.0
      %v656 = vsel %vm592, 1.0, 0.0
      %v657 = vsel %vm593, 1.0, 0.0
      %v658 = vsel %vm594, 1.0, 0.0
      %v659 = vsel %vm595, 1.0, 0.0
      %v660 = vsel %vm596, 1.0, 0.0
      %v661 = vsel %vm597, 1.0, 0.0
      %v662 = vsel %vm598, 1.0, 0.0
      %v663 = vsel %vm599, 1.0, 0.0
      %v664 = vsel %vm600, 1.0, 0.0
      %v665 = vsel %vm601, 1.0, 0.0
      %v666 = vsel %vm602, 1.0, 0.0
      %v667 = vsel %vm603, 1.0, 0.0
      %v668 = vsel %vm604, 1.0, 0.0
      %v669 = vsel %vm605, 1.0, 0.0
      %v670 = vsel %vm606, 1.0, 0.0
      %v671 = vsel %vm607, 1.0, 0.0
      %v672 = vsel %vm608, 1.0, 0.0
      %v673 = vsel %vm609, 1.0, 0.0
      %v674 = vsel %vm610, 1.0, 0.0
      %v675 = vsel %vm611, 1.0, 0.0
      %v676 = vsel %vm612, 1.0, 0.0
      %v677 = vsel %vm613, 1.0, 0.0
      %v678 = vsel %vm614, 1.0, 0.0
      %v679 = vsel %vm615, 1.0, 0.0
      %v680 = vsel %vm616, 1.0, 0.0
      %v681 = vsel %vm617, 1.0, 0.0
      %v682 = vsel %vm618, 1.0, 0.0
      %v683 = vsel %vm619, 1.0, 0.0
      %v684 = vsel %vm620, 1.0, 0.0
      %v685 = vsel %vm621, 1.0, 0.0
      %v686 = vsel %vm622, 1.0, 0.0
      %v687 = vsel %vm623, 1.0, 0.0
      %v688 = vsel %vm624, 1.0, 0.0
      %v689 = vsel %vm625, 1.0, 0.0
      %v690 = vld [vmem:[%s2] sm:$0xff]
      %v691 = vld [vmem:[%s2 + $0x8] sm:$0xff]
      %v692 = vld [vmem:[%s2 + $0x10] sm:$0xff]
      %v693 = vld [vmem:[%s2 + $0x18] sm:$0xff]
      %v694 = vld [vmem:[%s2 + $0x20] sm:$0xff]
      %v695 = vld [vmem:[%s2 + $0x28] sm:$0xff]
      %v696 = vld [vmem:[%s2 + $0x30] sm:$0xff]
      %v697 = vld [vmem:[%s2 + $0x38] sm:$0xff]
      %v698 = vld [vmem:[%s296] sm:$0xff]
      %v699 = vld [vmem:[%s296 + $0x8] sm:$0xff]
      %v700 = vld [vmem:[%s296 + $0x10] sm:$0xff]
      %v701 = vld [vmem:[%s296 + $0x18] sm:$0xff]
      %v702 = vld [vmem:[%s296 + $0x20] sm:$0xff]
      %v703 = vld [vmem:[%s296 + $0x28] sm:$0xff]
      %v704 = vld [vmem:[%s296 + $0x30] sm:$0xff]
      %v705 = vld [vmem:[%s296 + $0x38] sm:$0xff]
      %v706 = vld [vmem:[%s296 + $0x40] sm:$0xff]
      %v707 = vld [vmem:[%s296 + $0x48] sm:$0xff]
      %v708 = vld [vmem:[%s296 + $0x50] sm:$0xff]
      %v709 = vld [vmem:[%s296 + $0x58] sm:$0xff]
      %v710 = vld [vmem:[%s296 + $0x60] sm:$0xff]
      %v711 = vld [vmem:[%s296 + $0x68] sm:$0xff]
      %v712 = vld [vmem:[%s296 + $0x70] sm:$0xff]
      %v713 = vld [vmem:[%s296 + $0x78] sm:$0xff]
      %v714 = vld [vmem:[%s296 + $0x80] sm:$0xff]
      %v715 = vld [vmem:[%s296 + $0x88] sm:$0xff]
      %v716 = vld [vmem:[%s296 + $0x90] sm:$0xff]
      %v717 = vld [vmem:[%s296 + $0x98] sm:$0xff]
      %v718 = vld [vmem:[%s296 + $0xa0] sm:$0xff]
      %v719 = vld [vmem:[%s296 + $0xa8] sm:$0xff]
      %v720 = vld [vmem:[%s296 + $0xb0] sm:$0xff]
      %v721 = vld [vmem:[%s296 + $0xb8] sm:$0xff]
      %v722 = vld [vmem:[%s296 + $0xc0] sm:$0xff]
      %v723 = vld [vmem:[%s296 + $0xc8] sm:$0xff]
      %v724 = vld [vmem:[%s296 + $0xd0] sm:$0xff]
      %v725 = vld [vmem:[%s296 + $0xd8] sm:$0xff]
      %v726 = vld [vmem:[%s296 + $0xe0] sm:$0xff]
      %v727 = vld [vmem:[%s296 + $0xe8] sm:$0xff]
      %v728 = vld [vmem:[%s296 + $0xf0] sm:$0xff]
      %v729 = vld [vmem:[%s296 + $0xf8] sm:$0xff]
      %v730 = vld [vmem:[%s296 + $0x100] sm:$0xff]
      %v731 = vld [vmem:[%s296 + $0x108] sm:$0xff]
      %v732 = vld [vmem:[%s296 + $0x110] sm:$0xff]
      %v733 = vld [vmem:[%s296 + $0x118] sm:$0xff]
      %v734 = vld [vmem:[%s296 + $0x120] sm:$0xff]
      %v735 = vld [vmem:[%s296 + $0x128] sm:$0xff]
      %v736 = vld [vmem:[%s296 + $0x130] sm:$0xff]
      %v737 = vld [vmem:[%s296 + $0x138] sm:$0xff]
      %v738 = vld [vmem:[%s296 + $0x140] sm:$0xff]
      %v739 = vld [vmem:[%s296 + $0x148] sm:$0xff]
      %v740 = vld [vmem:[%s296 + $0x150] sm:$0xff]
      %v741 = vld [vmem:[%s296 + $0x158] sm:$0xff]
      %v742 = vld [vmem:[%s296 + $0x160] sm:$0xff]
      %v743 = vld [vmem:[%s296 + $0x168] sm:$0xff]
      %v744 = vld [vmem:[%s296 + $0x170] sm:$0xff]
      %v745 = vld [vmem:[%s296 + $0x178] sm:$0xff]
      %v746 = vld [vmem:[%s296 + $0x180] sm:$0xff]
      %v747 = vld [vmem:[%s296 + $0x188] sm:$0xff]
      %v748 = vld [vmem:[%s296 + $0x190] sm:$0xff]
      %v749 = vld [vmem:[%s296 + $0x198] sm:$0xff]
      %v750 = vld [vmem:[%s296 + $0x1a0] sm:$0xff]
      %v751 = vld [vmem:[%s296 + $0x1a8] sm:$0xff]
      %v752 = vld [vmem:[%s296 + $0x1b0] sm:$0xff]
      %v753 = vld [vmem:[%s296 + $0x1b8] sm:$0xff]
      %v754 = vld [vmem:[%s296 + $0x1c0] sm:$0xff]
      %v755 = vld [vmem:[%s296 + $0x1c8] sm:$0xff]
      %v756 = vld [vmem:[%s296 + $0x1d0] sm:$0xff]
      %v757 = vld [vmem:[%s296 + $0x1d8] sm:$0xff]
      %v758 = vld [vmem:[%s296 + $0x1e0] sm:$0xff]
      %v759 = vld [vmem:[%s296 + $0x1e8] sm:$0xff]
      %v760 = vld [vmem:[%s296 + $0x1f0] sm:$0xff]
      %v761 = vld [vmem:[%s296 + $0x1f8] sm:$0xff]
      %762 = vset.pattern.permute.xlu0 0
      %763 = vperm.xlu0 %762, %v698
      %v764 = vpop.permute.xlu0 %763
      %765 = vset.pattern.permute.xlu0 0
      %766 = vperm.xlu0 %765, %v699
      %v767 = vpop.permute.xlu0 %766
      %768 = vset.pattern.permute.xlu0 0
      %769 = vperm.xlu0 %768, %v700
      %v770 = vpop.permute.xlu0 %769
      %771 = vset.pattern.permute.xlu0 0
      %772 = vperm.xlu0 %771, %v701
      %v773 = vpop.permute.xlu0 %772
      %774 = vset.pattern.permute.xlu0 0
      %775 = vperm.xlu0 %774, %v702
      %v776 = vpop.permute.xlu0 %775
      %777 = vset.pattern.permute.xlu0 0
      %778 = vperm.xlu0 %777, %v703
      %v779 = vpop.permute.xlu0 %778
      %780 = vset.pattern.permute.xlu0 0
      %781 = vperm.xlu0 %780, %v704
      %v782 = vpop.permute.xlu0 %781
      %783 = vset.pattern.permute.xlu0 0
      %784 = vperm.xlu0 %783, %v705
      %v785 = vpop.permute.xlu0 %784
      %786 = vset.pattern.permute.xlu0 0
      %787 = vperm.xlu0 %786, %v706
      %v788 = vpop.permute.xlu0 %787
      %789 = vset.pattern.permute.xlu0 0
      %790 = vperm.xlu0 %789, %v707
      %v791 = vpop.permute.xlu0 %790
      %792 = vset.pattern.permute.xlu0 0
      %793 = vperm.xlu0 %792, %v708
      %v794 = vpop.permute.xlu0 %793
      %795 = vset.pattern.permute.xlu0 0
      %796 = vperm.xlu0 %795, %v709
      %v797 = vpop.permute.xlu0 %796
      %798 = vset.pattern.permute.xlu0 0
      %799 = vperm.xlu0 %798, %v710
      %v800 = vpop.permute.xlu0 %799
      %801 = vset.pattern.permute.xlu0 0
      %802 = vperm.xlu0 %801, %v711
      %v803 = vpop.permute.xlu0 %802
      %804 = vset.pattern.permute.xlu0 0
      %805 = vperm.xlu0 %804, %v712
      %v806 = vpop.permute.xlu0 %805
      %807 = vset.pattern.permute.xlu0 0
      %808 = vperm.xlu0 %807, %v713
      %v809 = vpop.permute.xlu0 %808
      %810 = vset.pattern.permute.xlu0 0
      %811 = vperm.xlu0 %810, %v714
      %v812 = vpop.permute.xlu0 %811
      %813 = vset.pattern.permute.xlu0 0
      %814 = vperm.xlu0 %813, %v715
      %v815 = vpop.permute.xlu0 %814
      %816 = vset.pattern.permute.xlu0 0
      %817 = vperm.xlu0 %816, %v716
      %v818 = vpop.permute.xlu0 %817
      %819 = vset.pattern.permute.xlu0 0
      %820 = vperm.xlu0 %819, %v717
      %v821 = vpop.permute.xlu0 %820
      %822 = vset.pattern.permute.xlu0 0
      %823 = vperm.xlu0 %822, %v718
      %v824 = vpop.permute.xlu0 %823
      %825 = vset.pattern.permute.xlu0 0
      %826 = vperm.xlu0 %825, %v719
      %v827 = vpop.permute.xlu0 %826
      %828 = vset.pattern.permute.xlu0 0
      %829 = vperm.xlu0 %828, %v720
      %v830 = vpop.permute.xlu0 %829
      %831 = vset.pattern.permute.xlu0 0
      %832 = vperm.xlu0 %831, %v721
      %v833 = vpop.permute.xlu0 %832
      %834 = vset.pattern.permute.xlu0 0
      %835 = vperm.xlu0 %834, %v722
      %v836 = vpop.permute.xlu0 %835
      %837 = vset.pattern.permute.xlu0 0
      %838 = vperm.xlu0 %837, %v723
      %v839 = vpop.permute.xlu0 %838
      %840 = vset.pattern.permute.xlu0 0
      %841 = vperm.xlu0 %840, %v724
      %v842 = vpop.permute.xlu0 %841
      %843 = vset.pattern.permute.xlu0 0
      %844 = vperm.xlu0 %843, %v725
      %v845 = vpop.permute.xlu0 %844
      %846 = vset.pattern.permute.xlu0 0
      %847 = vperm.xlu0 %846, %v726
      %v848 = vpop.permute.xlu0 %847
      %849 = vset.pattern.permute.xlu0 0
      %850 = vperm.xlu0 %849, %v727
      %v851 = vpop.permute.xlu0 %850
      %852 = vset.pattern.permute.xlu0 0
      %853 = vperm.xlu0 %852, %v728
      %v854 = vpop.permute.xlu0 %853
      %855 = vset.pattern.permute.xlu0 0
      %856 = vperm.xlu0 %855, %v729
      %v857 = vpop.permute.xlu0 %856
      %858 = vset.pattern.permute.xlu0 0
      %859 = vperm.xlu0 %858, %v730
      %v860 = vpop.permute.xlu0 %859
      %861 = vset.pattern.permute.xlu0 0
      %862 = vperm.xlu0 %861, %v731
      %v863 = vpop.permute.xlu0 %862
      %864 = vset.pattern.permute.xlu0 0
      %865 = vperm.xlu0 %864, %v732
      %v866 = vpop.permute.xlu0 %865
      %867 = vset.pattern.permute.xlu0 0
      %868 = vperm.xlu0 %867, %v733
      %v869 = vpop.permute.xlu0 %868
      %870 = vset.pattern.permute.xlu0 0
      %871 = vperm.xlu0 %870, %v734
      %v872 = vpop.permute.xlu0 %871
      %873 = vset.pattern.permute.xlu0 0
      %874 = vperm.xlu0 %873, %v735
      %v875 = vpop.permute.xlu0 %874
      %876 = vset.pattern.permute.xlu0 0
      %877 = vperm.xlu0 %876, %v736
      %v878 = vpop.permute.xlu0 %877
      %879 = vset.pattern.permute.xlu0 0
      %880 = vperm.xlu0 %879, %v737
      %v881 = vpop.permute.xlu0 %880
      %882 = vset.pattern.permute.xlu0 0
      %883 = vperm.xlu0 %882, %v738
      %v884 = vpop.permute.xlu0 %883
      %885 = vset.pattern.permute.xlu0 0
      %886 = vperm.xlu0 %885, %v739
      %v887 = vpop.permute.xlu0 %886
      %888 = vset.pattern.permute.xlu0 0
      %889 = vperm.xlu0 %888, %v740
      %v890 = vpop.permute.xlu0 %889
      %891 = vset.pattern.permute.xlu0 0
      %892 = vperm.xlu0 %891, %v741
      %v893 = vpop.permute.xlu0 %892
      %894 = vset.pattern.permute.xlu0 0
      %895 = vperm.xlu0 %894, %v742
      %v896 = vpop.permute.xlu0 %895
      %897 = vset.pattern.permute.xlu0 0
      %898 = vperm.xlu0 %897, %v743
      %v899 = vpop.permute.xlu0 %898
      %900 = vset.pattern.permute.xlu0 0
      %901 = vperm.xlu0 %900, %v744
      %v902 = vpop.permute.xlu0 %901
      %903 = vset.pattern.permute.xlu0 0
      %904 = vperm.xlu0 %903, %v745
      %v905 = vpop.permute.xlu0 %904
      %906 = vset.pattern.permute.xlu0 0
      %907 = vperm.xlu0 %906, %v746
      %v908 = vpop.permute.xlu0 %907
      %909 = vset.pattern.permute.xlu0 0
      %910 = vperm.xlu0 %909, %v747
      %v911 = vpop.permute.xlu0 %910
      %912 = vset.pattern.permute.xlu0 0
      %913 = vperm.xlu0 %912, %v748
      %v914 = vpop.permute.xlu0 %913
      %915 = vset.pattern.permute.xlu0 0
      %916 = vperm.xlu0 %915, %v749
      %v917 = vpop.permute.xlu0 %916
      %918 = vset.pattern.permute.xlu0 0
      %919 = vperm.xlu0 %918, %v750
      %v920 = vpop.permute.xlu0 %919
      %921 = vset.pattern.permute.xlu0 0
      %922 = vperm.xlu0 %921, %v751
      %v923 = vpop.permute.xlu0 %922
      %924 = vset.pattern.permute.xlu0 0
      %925 = vperm.xlu0 %924, %v752
      %v926 = vpop.permute.xlu0 %925
      %927 = vset.pattern.permute.xlu0 0
      %928 = vperm.xlu0 %927, %v753
      %v929 = vpop.permute.xlu0 %928
      %930 = vset.pattern.permute.xlu0 0
      %931 = vperm.xlu0 %930, %v754
      %v932 = vpop.permute.xlu0 %931
      %933 = vset.pattern.permute.xlu0 0
      %934 = vperm.xlu0 %933, %v755
      %v935 = vpop.permute.xlu0 %934
      %936 = vset.pattern.permute.xlu0 0
      %937 = vperm.xlu0 %936, %v756
      %v938 = vpop.permute.xlu0 %937
      %939 = vset.pattern.permute.xlu0 0
      %940 = vperm.xlu0 %939, %v757
      %v941 = vpop.permute.xlu0 %940
      %942 = vset.pattern.permute.xlu0 0
      %943 = vperm.xlu0 %942, %v758
      %v944 = vpop.permute.xlu0 %943
      %945 = vset.pattern.permute.xlu0 0
      %946 = vperm.xlu0 %945, %v759
      %v947 = vpop.permute.xlu0 %946
      %948 = vset.pattern.permute.xlu0 0
      %949 = vperm.xlu0 %948, %v760
      %v950 = vpop.permute.xlu0 %949
      %951 = vset.pattern.permute.xlu0 0
      %952 = vperm.xlu0 %951, %v761
      %v953 = vpop.permute.xlu0 %952
      %vm954 = vcmp.eq.s32.totalorder %v764, %v305
      %vm955 = vcmp.eq.s32.totalorder %v767, %v305
      %vm956 = vcmp.eq.s32.totalorder %v770, %v305
      %vm957 = vcmp.eq.s32.totalorder %v773, %v305
      %vm958 = vcmp.eq.s32.totalorder %v776, %v305
      %vm959 = vcmp.eq.s32.totalorder %v779, %v305
      %vm960 = vcmp.eq.s32.totalorder %v782, %v305
      %vm961 = vcmp.eq.s32.totalorder %v785, %v305
      %vm962 = vcmp.eq.s32.totalorder %v788, %v305
      %vm963 = vcmp.eq.s32.totalorder %v791, %v305
      %vm964 = vcmp.eq.s32.totalorder %v794, %v305
      %vm965 = vcmp.eq.s32.totalorder %v797, %v305
      %vm966 = vcmp.eq.s32.totalorder %v800, %v305
      %vm967 = vcmp.eq.s32.totalorder %v803, %v305
      %vm968 = vcmp.eq.s32.totalorder %v806, %v305
      %vm969 = vcmp.eq.s32.totalorder %v809, %v305
      %vm970 = vcmp.eq.s32.totalorder %v812, %v305
      %vm971 = vcmp.eq.s32.totalorder %v815, %v305
      %vm972 = vcmp.eq.s32.totalorder %v818, %v305
      %vm973 = vcmp.eq.s32.totalorder %v821, %v305
      %vm974 = vcmp.eq.s32.totalorder %v824, %v305
      %vm975 = vcmp.eq.s32.totalorder %v827, %v305
      %vm976 = vcmp.eq.s32.totalorder %v830, %v305
      %vm977 = vcmp.eq.s32.totalorder %v833, %v305
      %vm978 = vcmp.eq.s32.totalorder %v836, %v305
      %vm979 = vcmp.eq.s32.totalorder %v839, %v305
      %vm980 = vcmp.eq.s32.totalorder %v842, %v305
      %vm981 = vcmp.eq.s32.totalorder %v845, %v305
      %vm982 = vcmp.eq.s32.totalorder %v848, %v305
      %vm983 = vcmp.eq.s32.totalorder %v851, %v305
      %vm984 = vcmp.eq.s32.totalorder %v854, %v305
      %vm985 = vcmp.eq.s32.totalorder %v857, %v305
      %vm986 = vcmp.eq.s32.totalorder %v860, %v305
      %vm987 = vcmp.eq.s32.totalorder %v863, %v305
      %vm988 = vcmp.eq.s32.totalorder %v866, %v305
      %vm989 = vcmp.eq.s32.totalorder %v869, %v305
      %vm990 = vcmp.eq.s32.totalorder %v872, %v305
      %vm991 = vcmp.eq.s32.totalorder %v875, %v305
      %vm992 = vcmp.eq.s32.totalorder %v878, %v305
      %vm993 = vcmp.eq.s32.totalorder %v881, %v305
      %vm994 = vcmp.eq.s32.totalorder %v884, %v305
      %vm995 = vcmp.eq.s32.totalorder %v887, %v305
      %vm996 = vcmp.eq.s32.totalorder %v890, %v305
      %vm997 = vcmp.eq.s32.totalorder %v893, %v305
      %vm998 = vcmp.eq.s32.totalorder %v896, %v305
      %vm999 = vcmp.eq.s32.totalorder %v899, %v305
      %vm1000 = vcmp.eq.s32.totalorder %v902, %v305
      %vm1001 = vcmp.eq.s32.totalorder %v905, %v305
      %vm1002 = vcmp.eq.s32.totalorder %v908, %v305
      %vm1003 = vcmp.eq.s32.totalorder %v911, %v305
      %vm1004 = vcmp.eq.s32.totalorder %v914, %v305
      %vm1005 = vcmp.eq.s32.totalorder %v917, %v305
      %vm1006 = vcmp.eq.s32.totalorder %v920, %v305
      %vm1007 = vcmp.eq.s32.totalorder %v923, %v305
      %vm1008 = vcmp.eq.s32.totalorder %v926, %v305
      %vm1009 = vcmp.eq.s32.totalorder %v929, %v305
      %vm1010 = vcmp.eq.s32.totalorder %v932, %v305
      %vm1011 = vcmp.eq.s32.totalorder %v935, %v305
      %vm1012 = vcmp.eq.s32.totalorder %v938, %v305
      %vm1013 = vcmp.eq.s32.totalorder %v941, %v305
      %vm1014 = vcmp.eq.s32.totalorder %v944, %v305
      %vm1015 = vcmp.eq.s32.totalorder %v947, %v305
      %vm1016 = vcmp.eq.s32.totalorder %v950, %v305
      %vm1017 = vcmp.eq.s32.totalorder %v953, %v305
      %v1018 = vsel %vm954, 1.0, 0.0
      %v1019 = vsel %vm955, 1.0, 0.0
      %v1020 = vsel %vm956, 1.0, 0.0
      %v1021 = vsel %vm957, 1.0, 0.0
      %v1022 = vsel %vm958, 1.0, 0.0
      %v1023 = vsel %vm959, 1.0, 0.0
      %v1024 = vsel %vm960, 1.0, 0.0
      %v1025 = vsel %vm961, 1.0, 0.0
      %v1026 = vsel %vm962, 1.0, 0.0
      %v1027 = vsel %vm963, 1.0, 0.0
      %v1028 = vsel %vm964, 1.0, 0.0
      %v1029 = vsel %vm965, 1.0, 0.0
      %v1030 = vsel %vm966, 1.0, 0.0
      %v1031 = vsel %vm967, 1.0, 0.0
      %v1032 = vsel %vm968, 1.0, 0.0
      %v1033 = vsel %vm969, 1.0, 0.0
      %v1034 = vsel %vm970, 1.0, 0.0
      %v1035 = vsel %vm971, 1.0, 0.0
      %v1036 = vsel %vm972, 1.0, 0.0
      %v1037 = vsel %vm973, 1.0, 0.0
      %v1038 = vsel %vm974, 1.0, 0.0
      %v1039 = vsel %vm975, 1.0, 0.0
      %v1040 = vsel %vm976, 1.0, 0.0
      %v1041 = vsel %vm977, 1.0, 0.0
      %v1042 = vsel %vm978, 1.0, 0.0
      %v1043 = vsel %vm979, 1.0, 0.0
      %v1044 = vsel %vm980, 1.0, 0.0
      %v1045 = vsel %vm981, 1.0, 0.0
      %v1046 = vsel %vm982, 1.0, 0.0
      %v1047 = vsel %vm983, 1.0, 0.0
      %v1048 = vsel %vm984, 1.0, 0.0
      %v1049 = vsel %vm985, 1.0, 0.0
      %v1050 = vsel %vm986, 1.0, 0.0
      %v1051 = vsel %vm987, 1.0, 0.0
      %v1052 = vsel %vm988, 1.0, 0.0
      %v1053 = vsel %vm989, 1.0, 0.0
      %v1054 = vsel %vm990, 1.0, 0.0
      %v1055 = vsel %vm991, 1.0, 0.0
      %v1056 = vsel %vm992, 1.0, 0.0
      %v1057 = vsel %vm993, 1.0, 0.0
      %v1058 = vsel %vm994, 1.0, 0.0
      %v1059 = vsel %vm995, 1.0, 0.0
      %v1060 = vsel %vm996, 1.0, 0.0
      %v1061 = vsel %vm997, 1.0, 0.0
      %v1062 = vsel %vm998, 1.0, 0.0
      %v1063 = vsel %vm999, 1.0, 0.0
      %v1064 = vsel %vm1000, 1.0, 0.0
      %v1065 = vsel %vm1001, 1.0, 0.0
      %v1066 = vsel %vm1002, 1.0, 0.0
      %v1067 = vsel %vm1003, 1.0, 0.0
      %v1068 = vsel %vm1004, 1.0, 0.0
      %v1069 = vsel %vm1005, 1.0, 0.0
      %v1070 = vsel %vm1006, 1.0, 0.0
      %v1071 = vsel %vm1007, 1.0, 0.0
      %v1072 = vsel %vm1008, 1.0, 0.0
      %v1073 = vsel %vm1009, 1.0, 0.0
      %v1074 = vsel %vm1010, 1.0, 0.0
      %v1075 = vsel %vm1011, 1.0, 0.0
      %v1076 = vsel %vm1012, 1.0, 0.0
      %v1077 = vsel %vm1013, 1.0, 0.0
      %v1078 = vsel %vm1014, 1.0, 0.0
      %v1079 = vsel %vm1015, 1.0, 0.0
      %v1080 = vsel %vm1016, 1.0, 0.0
      %v1081 = vsel %vm1017, 1.0, 0.0
      %v1082 = vld [vmem:[%s3] sm:$0xff]
      %v1083 = vld [vmem:[%s3 + $0x8] sm:$0xff]
      %v1084 = vld [vmem:[%s3 + $0x10] sm:$0xff]
      %v1085 = vld [vmem:[%s3 + $0x18] sm:$0xff]
      %v1086 = vld [vmem:[%s3 + $0x20] sm:$0xff]
      %v1087 = vld [vmem:[%s3 + $0x28] sm:$0xff]
      %v1088 = vld [vmem:[%s3 + $0x30] sm:$0xff]
      %v1089 = vld [vmem:[%s3 + $0x38] sm:$0xff]
      %vm1090 = vcmask 523264
      %v1092 = vsel %vm1090, %v1018, 0
      %v1095 = vsel %vm1090, %v1019, 0
      %v1098 = vsel %vm1090, %v1020, 0
      %v1101 = vsel %vm1090, %v1021, 0
      %v1104 = vsel %vm1090, %v1022, 0
      %v1107 = vsel %vm1090, %v1023, 0
      %v1110 = vsel %vm1090, %v1024, 0
      %v1113 = vsel %vm1090, %v1025, 0
      %v1116 = vsel %vm1090, %v1026, 0
      %v1119 = vsel %vm1090, %v1027, 0
      %v1122 = vsel %vm1090, %v1028, 0
      %v1125 = vsel %vm1090, %v1029, 0
      %v1128 = vsel %vm1090, %v1030, 0
      %v1131 = vsel %vm1090, %v1031, 0
      %v1134 = vsel %vm1090, %v1032, 0
      %v1137 = vsel %vm1090, %v1033, 0
      %v1140 = vsel %vm1090, %v1034, 0
      %v1143 = vsel %vm1090, %v1035, 0
      %v1146 = vsel %vm1090, %v1036, 0
      %v1149 = vsel %vm1090, %v1037, 0
      %v1152 = vsel %vm1090, %v1038, 0
      %v1155 = vsel %vm1090, %v1039, 0
      %v1158 = vsel %vm1090, %v1040, 0
      %v1161 = vsel %vm1090, %v1041, 0
      %v1164 = vsel %vm1090, %v1042, 0
      %v1167 = vsel %vm1090, %v1043, 0
      %v1170 = vsel %vm1090, %v1044, 0
      %v1173 = vsel %vm1090, %v1045, 0
      %v1176 = vsel %vm1090, %v1046, 0
      %v1179 = vsel %vm1090, %v1047, 0
      %v1182 = vsel %vm1090, %v1048, 0
      %v1185 = vsel %vm1090, %v1049, 0
      %v1188 = vsel %vm1090, %v1050, 0
      %v1191 = vsel %vm1090, %v1051, 0
      %v1194 = vsel %vm1090, %v1052, 0
      %v1197 = vsel %vm1090, %v1053, 0
      %v1200 = vsel %vm1090, %v1054, 0
      %v1203 = vsel %vm1090, %v1055, 0
      %v1206 = vsel %vm1090, %v1056, 0
      %v1209 = vsel %vm1090, %v1057, 0
      %v1212 = vsel %vm1090, %v1058, 0
      %v1215 = vsel %vm1090, %v1059, 0
      %v1218 = vsel %vm1090, %v1060, 0
      %v1221 = vsel %vm1090, %v1061, 0
      %v1224 = vsel %vm1090, %v1062, 0
      %v1227 = vsel %vm1090, %v1063, 0
      %v1230 = vsel %vm1090, %v1064, 0
      %v1233 = vsel %vm1090, %v1065, 0
      %v1236 = vsel %vm1090, %v1066, 0
      %v1239 = vsel %vm1090, %v1067, 0
      %v1242 = vsel %vm1090, %v1068, 0
      %v1245 = vsel %vm1090, %v1069, 0
      %v1248 = vsel %vm1090, %v1070, 0
      %v1251 = vsel %vm1090, %v1071, 0
      %v1254 = vsel %vm1090, %v1072, 0
      %v1257 = vsel %vm1090, %v1073, 0
      %v1260 = vsel %vm1090, %v1074, 0
      %v1263 = vsel %vm1090, %v1075, 0
      %v1266 = vsel %vm1090, %v1076, 0
      %v1269 = vsel %vm1090, %v1077, 0
      %v1272 = vsel %vm1090, %v1078, 0
      %v1275 = vsel %vm1090, %v1079, 0
      %v1278 = vsel %vm1090, %v1080, 0
      %v1281 = vsel %vm1090, %v1081, 0
      %1283 = vmatprep.subr.mxu0 0.0
      %1284 = vmatpush1.msra.mxu0 %v1082
      %1285 = vmatprep.subr.mxu0 0.0
      %1286 = vmatpush1.msra.mxu0 %v1083
      %1287 = vmatprep.subr.mxu0 0.0
      %1288 = vmatpush1.msra.mxu0 %v1084
      %1289 = vmatprep.subr.mxu0 0.0
      %1290 = vmatpush1.msra.mxu0 %v1085
      %1291 = vmatprep.subr.mxu0 0.0
      %1292 = vmatpush1.msra.mxu0 %v1086
      %1293 = vmatprep.subr.mxu0 0.0
      %1294 = vmatpush1.msra.mxu0 %v1087
      %1295 = vmatprep.subr.mxu0 0.0
      %1296 = vmatpush1.msra.mxu0 %v1088
      %1297 = vmatprep.subr.mxu0 0.0
      %1298 = vmatpush1.msra.mxu0 %v1089
      %1299 = vmatprep.subr.mxu0 0.0
      %1300 = vmatpush1.msra.mxu0 0.0
      %1301 = vmatprep.subr.mxu0 0.0
      %1302 = vmatpush1.msra.mxu0 0.0
      %1303 = vmatprep.subr.mxu0 0.0
      %1304 = vmatpush1.msra.mxu0 0.0
      %1305 = vmatprep.subr.mxu0 0.0
      %1306 = vmatpush1.msra.mxu0 0.0
      %1307 = vmatprep.subr.mxu0 0.0
      %1308 = vmatpush1.msra.mxu0 0.0
      %1309 = vmatprep.subr.mxu0 0.0
      %1310 = vmatpush1.msra.mxu0 0.0
      %1311 = vmatprep.subr.mxu0 0.0
      %1312 = vmatpush1.msra.mxu0 0.0
      %1313 = vmatprep.subr.mxu0 0.0
      %1314 = vmatpush1.msra.mxu0 0.0
      %1315 = vmatprep.subr.mxu0 0.0
      %1316 = vmatpush1.msra.mxu0 0.0
      %1317 = vmatprep.subr.mxu0 0.0
      %1318 = vmatpush1.msra.mxu0 0.0
      %1319 = vmatprep.subr.mxu0 0.0
      %1320 = vmatpush1.msra.mxu0 0.0
      %1321 = vmatprep.subr.mxu0 0.0
      %1322 = vmatpush1.msra.mxu0 0.0
      %1323 = vmatprep.subr.mxu0 0.0
      %1324 = vmatpush1.msra.mxu0 0.0
      %1325 = vmatprep.subr.mxu0 0.0
      %1326 = vmatpush1.msra.mxu0 0.0
      %1327 = vmatprep.subr.mxu0 0.0
      %1328 = vmatpush1.msra.mxu0 0.0
      %1329 = vmatprep.subr.mxu0 0.0
      %1330 = vmatpush1.msra.mxu0 0.0
      %1331 = vmatprep.subr.mxu0 0.0
      %1332 = vmatpush1.msra.mxu0 0.0
      %1333 = vmatprep.subr.mxu0 0.0
      %1334 = vmatpush1.msra.mxu0 0.0
      %1335 = vmatprep.subr.mxu0 0.0
      %1336 = vmatpush1.msra.mxu0 0.0
      %1337 = vmatprep.subr.mxu0 0.0
      %1338 = vmatpush1.msra.mxu0 0.0
      %1339 = vmatprep.subr.mxu0 0.0
      %1340 = vmatpush1.msra.mxu0 0.0
      %1341 = vmatprep.subr.mxu0 0.0
      %1342 = vmatpush1.msra.mxu0 0.0
      %1343 = vmatprep.subr.mxu0 0.0
      %1344 = vmatpush1.msra.mxu0 0.0
      %1345 = vmatprep.subr.mxu0 0.0
      %1346 = vmatpush1.msra.mxu0 0.0
      %1347 = vmatprep.mubr.f32.mxu0 0.0
      %1348 = vmatmul.mubr.f32.gmra.mrb[0].mxu0 %v1092
      %v1349 = vpop.f32.mrb[0].mxu0
      %v1350 = vadd.f32 0.0, %v1349
      %v1351 = vpop.f32.mrb[0].mxu0
      %1352 = vmatprep.mubr.f32.mxu0 0.0
      %1353 = vmatmul.mubr.f32.gmra.mrb[0].mxu0 %v1095
      %v1354 = vpop.f32.mrb[0].mxu0
      %v1355 = vadd.f32 0.0, %v1354
      %v1356 = vpop.f32.mrb[0].mxu0
      %1357 = vmatprep.mubr.f32.mxu0 0.0
      %1358 = vmatmul.mubr.f32.gmra.mrb[0].mxu0 %v1098
      %v1359 = vpop.f32.mrb[0].mxu0
      %v1360 = vadd.f32 0.0, %v1359
      %v1361 = vpop.f32.mrb[0].mxu0
      %1362 = vmatprep.mubr.f32.mxu0 0.0
      %1363 = vmatmul.mubr.f32.gmra.mrb[0].mxu0 %v1101
      %v1364 = vpop.f32.mrb[0].mxu0
      %v1365 = vadd.f32 0.0, %v1364
      %v1366 = vpop.f32.mrb[0].mxu0
      %1367 = vmatprep.mubr.f32.mxu0 0.0
      %1368 = vmatmul.mubr.f32.gmra.mrb[0].mxu0 %v1104
      %v1369 = vpop.f32.mrb[0].mxu0
      %v1370 = vadd.f32 0.0, %v1369
      %v1371 = vpop.f32.mrb[0].mxu0
      %1372 = vmatprep.mubr.f32.mxu0 0.0
      %1373 = vmatmul.mubr.f32.gmra.mrb[0].mxu0 %v1107
      %v1374 = vpop.f32.mrb[0].mxu0
      %v1375 = vadd.f32 0.0, %v1374
      %v1376 = vpop.f32.mrb[0].mxu0
      %1377 = vmatprep.mubr.f32.mxu0 0.0
      %1378 = vmatmul.mubr.f32.gmra.mrb[0].mxu0 %v1110
      %v1379 = vpop.f32.mrb[0].mxu0
      %v1380 = vadd.f32 0.0, %v1379
      %v1381 = vpop.f32.mrb[0].mxu0
      %1382 = vmatprep.mubr.f32.mxu0 0.0
      %1383 = vmatmul.mubr.f32.gmra.mrb[0].mxu0 %v1113
      %v1384 = vpop.f32.mrb[0].mxu0
      %v1385 = vadd.f32 0.0, %v1384
      %v1386 = vpop.f32.mrb[0].mxu0
      %1387 = vmatprep.mubr.f32.mxu0 0.0
      %1388 = vmatmul.mubr.f32.gmra.mrb[0].mxu0 %v1116
      %v1389 = vpop.f32.mrb[0].mxu0
      %v1390 = vadd.f32 0.0, %v1389
      %v1391 = vpop.f32.mrb[0].mxu0
      %1392 = vmatprep.mubr.f32.mxu0 0.0
      %1393 = vmatmul.mubr.f32.gmra.mrb[0].mxu0 %v1119
      %v1394 = vpop.f32.mrb[0].mxu0
      %v1395 = vadd.f32 0.0, %v1394
      %v1396 = vpop.f32.mrb[0].mxu0
      %1397 = vmatprep.mubr.f32.mxu0 0.0
      %1398 = vmatmul.mubr.f32.gmra.mrb[0].mxu0 %v1122
      %v1399 = vpop.f32.mrb[0].mxu0
      %v1400 = vadd.f32 0.0, %v1399
      %v1401 = vpop.f32.mrb[0].mxu0
      %1402 = vmatprep.mubr.f32.mxu0 0.0
      %1403 = vmatmul.mubr.f32.gmra.mrb[0].mxu0 %v1125
      %v1404 = vpop.f32.mrb[0].mxu0
      %v1405 = vadd.f32 0.0, %v1404
      %v1406 = vpop.f32.mrb[0].mxu0
      %1407 = vmatprep.mubr.f32.mxu0 0.0
      %1408 = vmatmul.mubr.f32.gmra.mrb[0].mxu0 %v1128
      %v1409 = vpop.f32.mrb[0].mxu0
      %v1410 = vadd.f32 0.0, %v1409
      %v1411 = vpop.f32.mrb[0].mxu0
      %1412 = vmatprep.mubr.f32.mxu0 0.0
      %1413 = vmatmul.mubr.f32.gmra.mrb[0].mxu0 %v1131
      %v1414 = vpop.f32.mrb[0].mxu0
      %v1415 = vadd.f32 0.0, %v1414
      %v1416 = vpop.f32.mrb[0].mxu0
      %1417 = vmatprep.mubr.f32.mxu0 0.0
      %1418 = vmatmul.mubr.f32.gmra.mrb[0].mxu0 %v1134
      %v1419 = vpop.f32.mrb[0].mxu0
      %v1420 = vadd.f32 0.0, %v1419
      %v1421 = vpop.f32.mrb[0].mxu0
      %1422 = vmatprep.mubr.f32.mxu0 0.0
      %1423 = vmatmul.mubr.f32.gmra.mrb[0].mxu0 %v1137
      %v1424 = vpop.f32.mrb[0].mxu0
      %v1425 = vadd.f32 0.0, %v1424
      %v1426 = vpop.f32.mrb[0].mxu0
      %1427 = vmatprep.mubr.f32.mxu0 0.0
      %1428 = vmatmul.mubr.f32.gmra.mrb[0].mxu0 %v1140
      %v1429 = vpop.f32.mrb[0].mxu0
      %v1430 = vadd.f32 0.0, %v1429
      %v1431 = vpop.f32.mrb[0].mxu0
      %1432 = vmatprep.mubr.f32.mxu0 0.0
      %1433 = vmatmul.mubr.f32.gmra.mrb[0].mxu0 %v1143
      %v1434 = vpop.f32.mrb[0].mxu0
      %v1435 = vadd.f32 0.0, %v1434
      %v1436 = vpop.f32.mrb[0].mxu0
      %1437 = vmatprep.mubr.f32.mxu0 0.0
      %1438 = vmatmul.mubr.f32.gmra.mrb[0].mxu0 %v1146
      %v1439 = vpop.f32.mrb[0].mxu0
      %v1440 = vadd.f32 0.0, %v1439
      %v1441 = vpop.f32.mrb[0].mxu0
      %1442 = vmatprep.mubr.f32.mxu0 0.0
      %1443 = vmatmul.mubr.f32.gmra.mrb[0].mxu0 %v1149
      %v1444 = vpop.f32.mrb[0].mxu0
      %v1445 = vadd.f32 0.0, %v1444
      %v1446 = vpop.f32.mrb[0].mxu0
      %1447 = vmatprep.mubr.f32.mxu0 0.0
      %1448 = vmatmul.mubr.f32.gmra.mrb[0].mxu0 %v1152
      %v1449 = vpop.f32.mrb[0].mxu0
      %v1450 = vadd.f32 0.0, %v1449
      %v1451 = vpop.f32.mrb[0].mxu0
      %1452 = vmatprep.mubr.f32.mxu0 0.0
      %1453 = vmatmul.mubr.f32.gmra.mrb[0].mxu0 %v1155
      %v1454 = vpop.f32.mrb[0].mxu0
      %v1455 = vadd.f32 0.0, %v1454
      %v1456 = vpop.f32.mrb[0].mxu0
      %1457 = vmatprep.mubr.f32.mxu0 0.0
      %1458 = vmatmul.mubr.f32.gmra.mrb[0].mxu0 %v1158
      %v1459 = vpop.f32.mrb[0].mxu0
      %v1460 = vadd.f32 0.0, %v1459
      %v1461 = vpop.f32.mrb[0].mxu0
      %1462 = vmatprep.mubr.f32.mxu0 0.0
      %1463 = vmatmul.mubr.f32.gmra.mrb[0].mxu0 %v1161
      %v1464 = vpop.f32.mrb[0].mxu0
      %v1465 = vadd.f32 0.0, %v1464
      %v1466 = vpop.f32.mrb[0].mxu0
      %1467 = vmatprep.mubr.f32.mxu0 0.0
      %1468 = vmatmul.mubr.f32.gmra.mrb[0].mxu0 %v1164
      %v1469 = vpop.f32.mrb[0].mxu0
      %v1470 = vadd.f32 0.0, %v1469
      %v1471 = vpop.f32.mrb[0].mxu0
      %1472 = vmatprep.mubr.f32.mxu0 0.0
      %1473 = vmatmul.mubr.f32.gmra.mrb[0].mxu0 %v1167
      %v1474 = vpop.f32.mrb[0].mxu0
      %v1475 = vadd.f32 0.0, %v1474
      %v1476 = vpop.f32.mrb[0].mxu0
      %1477 = vmatprep.mubr.f32.mxu0 0.0
      %1478 = vmatmul.mubr.f32.gmra.mrb[0].mxu0 %v1170
      %v1479 = vpop.f32.mrb[0].mxu0
      %v1480 = vadd.f32 0.0, %v1479
      %v1481 = vpop.f32.mrb[0].mxu0
      %1482 = vmatprep.mubr.f32.mxu0 0.0
      %1483 = vmatmul.mubr.f32.gmra.mrb[0].mxu0 %v1173
      %v1484 = vpop.f32.mrb[0].mxu0
      %v1485 = vadd.f32 0.0, %v1484
      %v1486 = vpop.f32.mrb[0].mxu0
      %1487 = vmatprep.mubr.f32.mxu0 0.0
      %1488 = vmatmul.mubr.f32.gmra.mrb[0].mxu0 %v1176
      %v1489 = vpop.f32.mrb[0].mxu0
      %v1490 = vadd.f32 0.0, %v1489
      %v1491 = vpop.f32.mrb[0].mxu0
      %1492 = vmatprep.mubr.f32.mxu0 0.0
      %1493 = vmatmul.mubr.f32.gmra.mrb[0].mxu0 %v1179
      %v1494 = vpop.f32.mrb[0].mxu0
      %v1495 = vadd.f32 0.0, %v1494
      %v1496 = vpop.f32.mrb[0].mxu0
      %1497 = vmatprep.mubr.f32.mxu0 0.0
      %1498 = vmatmul.mubr.f32.gmra.mrb[0].mxu0 %v1182
      %v1499 = vpop.f32.mrb[0].mxu0
      %v1500 = vadd.f32 0.0, %v1499
      %v1501 = vpop.f32.mrb[0].mxu0
      %1502 = vmatprep.mubr.f32.mxu0 0.0
      %1503 = vmatmul.mubr.f32.gmra.mrb[0].mxu0 %v1185
      %v1504 = vpop.f32.mrb[0].mxu0
      %v1505 = vadd.f32 0.0, %v1504
      %v1506 = vpop.f32.mrb[0].mxu0
      %1507 = vmatprep.mubr.f32.mxu0 0.0
      %1508 = vmatmul.mubr.f32.gmra.mrb[0].mxu0 %v1188
      %v1509 = vpop.f32.mrb[0].mxu0
      %v1510 = vadd.f32 0.0, %v1509
      %v1511 = vpop.f32.mrb[0].mxu0
      %1512 = vmatprep.mubr.f32.mxu0 0.0
      %1513 = vmatmul.mubr.f32.gmra.mrb[0].mxu0 %v1191
      %v1514 = vpop.f32.mrb[0].mxu0
      %v1515 = vadd.f32 0.0, %v1514
      %v1516 = vpop.f32.mrb[0].mxu0
      %1517 = vmatprep.mubr.f32.mxu0 0.0
      %1518 = vmatmul.mubr.f32.gmra.mrb[0].mxu0 %v1194
      %v1519 = vpop.f32.mrb[0].mxu0
      %v1520 = vadd.f32 0.0, %v1519
      %v1521 = vpop.f32.mrb[0].mxu0
      %1522 = vmatprep.mubr.f32.mxu0 0.0
      %1523 = vmatmul.mubr.f32.gmra.mrb[0].mxu0 %v1197
      %v1524 = vpop.f32.mrb[0].mxu0
      %v1525 = vadd.f32 0.0, %v1524
      %v1526 = vpop.f32.mrb[0].mxu0
      %1527 = vmatprep.mubr.f32.mxu0 0.0
      %1528 = vmatmul.mubr.f32.gmra.mrb[0].mxu0 %v1200
      %v1529 = vpop.f32.mrb[0].mxu0
      %v1530 = vadd.f32 0.0, %v1529
      %v1531 = vpop.f32.mrb[0].mxu0
      %1532 = vmatprep.mubr.f32.mxu0 0.0
      %1533 = vmatmul.mubr.f32.gmra.mrb[0].mxu0 %v1203
      %v1534 = vpop.f32.mrb[0].mxu0
      %v1535 = vadd.f32 0.0, %v1534
      %v1536 = vpop.f32.mrb[0].mxu0
      %1537 = vmatprep.mubr.f32.mxu0 0.0
      %1538 = vmatmul.mubr.f32.gmra.mrb[0].mxu0 %v1206
      %v1539 = vpop.f32.mrb[0].mxu0
      %v1540 = vadd.f32 0.0, %v1539
      %v1541 = vpop.f32.mrb[0].mxu0
      %1542 = vmatprep.mubr.f32.mxu0 0.0
      %1543 = vmatmul.mubr.f32.gmra.mrb[0].mxu0 %v1209
      %v1544 = vpop.f32.mrb[0].mxu0
      %v1545 = vadd.f32 0.0, %v1544
      %v1546 = vpop.f32.mrb[0].mxu0
      %1547 = vmatprep.mubr.f32.mxu0 0.0
      %1548 = vmatmul.mubr.f32.gmra.mrb[0].mxu0 %v1212
      %v1549 = vpop.f32.mrb[0].mxu0
      %v1550 = vadd.f32 0.0, %v1549
      %v1551 = vpop.f32.mrb[0].mxu0
      %1552 = vmatprep.mubr.f32.mxu0 0.0
      %1553 = vmatmul.mubr.f32.gmra.mrb[0].mxu0 %v1215
      %v1554 = vpop.f32.mrb[0].mxu0
      %v1555 = vadd.f32 0.0, %v1554
      %v1556 = vpop.f32.mrb[0].mxu0
      %1557 = vmatprep.mubr.f32.mxu0 0.0
      %1558 = vmatmul.mubr.f32.gmra.mrb[0].mxu0 %v1218
      %v1559 = vpop.f32.mrb[0].mxu0
      %v1560 = vadd.f32 0.0, %v1559
      %v1561 = vpop.f32.mrb[0].mxu0
      %1562 = vmatprep.mubr.f32.mxu0 0.0
      %1563 = vmatmul.mubr.f32.gmra.mrb[0].mxu0 %v1221
      %v1564 = vpop.f32.mrb[0].mxu0
      %v1565 = vadd.f32 0.0, %v1564
      %v1566 = vpop.f32.mrb[0].mxu0
      %1567 = vmatprep.mubr.f32.mxu0 0.0
      %1568 = vmatmul.mubr.f32.gmra.mrb[0].mxu0 %v1224
      %v1569 = vpop.f32.mrb[0].mxu0
      %v1570 = vadd.f32 0.0, %v1569
      %v1571 = vpop.f32.mrb[0].mxu0
      %1572 = vmatprep.mubr.f32.mxu0 0.0
      %1573 = vmatmul.mubr.f32.gmra.mrb[0].mxu0 %v1227
      %v1574 = vpop.f32.mrb[0].mxu0
      %v1575 = vadd.f32 0.0, %v1574
      %v1576 = vpop.f32.mrb[0].mxu0
      %1577 = vmatprep.mubr.f32.mxu0 0.0
      %1578 = vmatmul.mubr.f32.gmra.mrb[0].mxu0 %v1230
      %v1579 = vpop.f32.mrb[0].mxu0
      %v1580 = vadd.f32 0.0, %v1579
      %v1581 = vpop.f32.mrb[0].mxu0
      %1582 = vmatprep.mubr.f32.mxu0 0.0
      %1583 = vmatmul.mubr.f32.gmra.mrb[0].mxu0 %v1233
      %v1584 = vpop.f32.mrb[0].mxu0
      %v1585 = vadd.f32 0.0, %v1584
      %v1586 = vpop.f32.mrb[0].mxu0
      %1587 = vmatprep.mubr.f32.mxu0 0.0
      %1588 = vmatmul.mubr.f32.gmra.mrb[0].mxu0 %v1236
      %v1589 = vpop.f32.mrb[0].mxu0
      %v1590 = vadd.f32 0.0, %v1589
      %v1591 = vpop.f32.mrb[0].mxu0
      %1592 = vmatprep.mubr.f32.mxu0 0.0
      %1593 = vmatmul.mubr.f32.gmra.mrb[0].mxu0 %v1239
      %v1594 = vpop.f32.mrb[0].mxu0
      %v1595 = vadd.f32 0.0, %v1594
      %v1596 = vpop.f32.mrb[0].mxu0
      %1597 = vmatprep.mubr.f32.mxu0 0.0
      %1598 = vmatmul.mubr.f32.gmra.mrb[0].mxu0 %v1242
      %v1599 = vpop.f32.mrb[0].mxu0
      %v1600 = vadd.f32 0.0, %v1599
      %v1601 = vpop.f32.mrb[0].mxu0
      %1602 = vmatprep.mubr.f32.mxu0 0.0
      %1603 = vmatmul.mubr.f32.gmra.mrb[0].mxu0 %v1245
      %v1604 = vpop.f32.mrb[0].mxu0
      %v1605 = vadd.f32 0.0, %v1604
      %v1606 = vpop.f32.mrb[0].mxu0
      %1607 = vmatprep.mubr.f32.mxu0 0.0
      %1608 = vmatmul.mubr.f32.gmra.mrb[0].mxu0 %v1248
      %v1609 = vpop.f32.mrb[0].mxu0
      %v1610 = vadd.f32 0.0, %v1609
      %v1611 = vpop.f32.mrb[0].mxu0
      %1612 = vmatprep.mubr.f32.mxu0 0.0
      %1613 = vmatmul.mubr.f32.gmra.mrb[0].mxu0 %v1251
      %v1614 = vpop.f32.mrb[0].mxu0
      %v1615 = vadd.f32 0.0, %v1614
      %v1616 = vpop.f32.mrb[0].mxu0
      %1617 = vmatprep.mubr.f32.mxu0 0.0
      %1618 = vmatmul.mubr.f32.gmra.mrb[0].mxu0 %v1254
      %v1619 = vpop.f32.mrb[0].mxu0
      %v1620 = vadd.f32 0.0, %v1619
      %v1621 = vpop.f32.mrb[0].mxu0
      %1622 = vmatprep.mubr.f32.mxu0 0.0
      %1623 = vmatmul.mubr.f32.gmra.mrb[0].mxu0 %v1257
      %v1624 = vpop.f32.mrb[0].mxu0
      %v1625 = vadd.f32 0.0, %v1624
      %v1626 = vpop.f32.mrb[0].mxu0
      %1627 = vmatprep.mubr.f32.mxu0 0.0
      %1628 = vmatmul.mubr.f32.gmra.mrb[0].mxu0 %v1260
      %v1629 = vpop.f32.mrb[0].mxu0
      %v1630 = vadd.f32 0.0, %v1629
      %v1631 = vpop.f32.mrb[0].mxu0
      %1632 = vmatprep.mubr.f32.mxu0 0.0
      %1633 = vmatmul.mubr.f32.gmra.mrb[0].mxu0 %v1263
      %v1634 = vpop.f32.mrb[0].mxu0
      %v1635 = vadd.f32 0.0, %v1634
      %v1636 = vpop.f32.mrb[0].mxu0
      %1637 = vmatprep.mubr.f32.mxu0 0.0
      %1638 = vmatmul.mubr.f32.gmra.mrb[0].mxu0 %v1266
      %v1639 = vpop.f32.mrb[0].mxu0
      %v1640 = vadd.f32 0.0, %v1639
      %v1641 = vpop.f32.mrb[0].mxu0
      %1642 = vmatprep.mubr.f32.mxu0 0.0
      %1643 = vmatmul.mubr.f32.gmra.mrb[0].mxu0 %v1269
      %v1644 = vpop.f32.mrb[0].mxu0
      %v1645 = vadd.f32 0.0, %v1644
      %v1646 = vpop.f32.mrb[0].mxu0
      %1647 = vmatprep.mubr.f32.mxu0 0.0
      %1648 = vmatmul.mubr.f32.gmra.mrb[0].mxu0 %v1272
      %v1649 = vpop.f32.mrb[0].mxu0
      %v1650 = vadd.f32 0.0, %v1649
      %v1651 = vpop.f32.mrb[0].mxu0
      %1652 = vmatprep.mubr.f32.mxu0 0.0
      %1653 = vmatmul.mubr.f32.gmra.mrb[0].mxu0 %v1275
      %v1654 = vpop.f32.mrb[0].mxu0
      %v1655 = vadd.f32 0.0, %v1654
      %v1656 = vpop.f32.mrb[0].mxu0
      %1657 = vmatprep.mubr.f32.mxu0 0.0
      %1658 = vmatmul.mubr.f32.gmra.mrb[0].mxu0 %v1278
      %v1659 = vpop.f32.mrb[0].mxu0
      %v1660 = vadd.f32 0.0, %v1659
      %v1661 = vpop.f32.mrb[0].mxu0
      %1662 = vmatprep.mubr.f32.mxu0 0.0
      %1663 = vmatmul.mubr.f32.gmra.mrb[0].mxu0 %v1281
      %v1664 = vpop.f32.mrb[0].mxu0
      %v1665 = vadd.f32 0.0, %v1664
      %v1666 = vpop.f32.mrb[0].mxu0
      %1667 = vdwg.mxu0
      %v1669 = vsel %vm1090, %v626, 0
      %v1672 = vsel %vm1090, %v627, 0
      %v1675 = vsel %vm1090, %v628, 0
      %v1678 = vsel %vm1090, %v629, 0
      %v1681 = vsel %vm1090, %v630, 0
      %v1684 = vsel %vm1090, %v631, 0
      %v1687 = vsel %vm1090, %v632, 0
      %v1690 = vsel %vm1090, %v633, 0
      %v1693 = vsel %vm1090, %v634, 0
      %v1696 = vsel %vm1090, %v635, 0
      %v1699 = vsel %vm1090, %v636, 0
      %v1702 = vsel %vm1090, %v637, 0
      %v1705 = vsel %vm1090, %v638, 0
      %v1708 = vsel %vm1090, %v639, 0
      %v1711 = vsel %vm1090, %v640, 0
      %v1714 = vsel %vm1090, %v641, 0
      %v1717 = vsel %vm1090, %v642, 0
      %v1720 = vsel %vm1090, %v643, 0
      %v1723 = vsel %vm1090, %v644, 0
      %v1726 = vsel %vm1090, %v645, 0
      %v1729 = vsel %vm1090, %v646, 0
      %v1732 = vsel %vm1090, %v647, 0
      %v1735 = vsel %vm1090, %v648, 0
      %v1738 = vsel %vm1090, %v649, 0
      %v1741 = vsel %vm1090, %v650, 0
      %v1744 = vsel %vm1090, %v651, 0
      %v1747 = vsel %vm1090, %v652, 0
      %v1750 = vsel %vm1090, %v653, 0
      %v1753 = vsel %vm1090, %v654, 0
      %v1756 = vsel %vm1090, %v655, 0
      %v1759 = vsel %vm1090, %v656, 0
      %v1762 = vsel %vm1090, %v657, 0
      %v1765 = vsel %vm1090, %v658, 0
      %v1768 = vsel %vm1090, %v659, 0
      %v1771 = vsel %vm1090, %v660, 0
      %v1774 = vsel %vm1090, %v661, 0
      %v1777 = vsel %vm1090, %v662, 0
      %v1780 = vsel %vm1090, %v663, 0
      %v1783 = vsel %vm1090, %v664, 0
      %v1786 = vsel %vm1090, %v665, 0
      %v1789 = vsel %vm1090, %v666, 0
      %v1792 = vsel %vm1090, %v667, 0
      %v1795 = vsel %vm1090, %v668, 0
      %v1798 = vsel %vm1090, %v669, 0
      %v1801 = vsel %vm1090, %v670, 0
      %v1804 = vsel %vm1090, %v671, 0
      %v1807 = vsel %vm1090, %v672, 0
      %v1810 = vsel %vm1090, %v673, 0
      %v1813 = vsel %vm1090, %v674, 0
      %v1816 = vsel %vm1090, %v675, 0
      %v1819 = vsel %vm1090, %v676, 0
      %v1822 = vsel %vm1090, %v677, 0
      %v1825 = vsel %vm1090, %v678, 0
      %v1828 = vsel %vm1090, %v679, 0
      %v1831 = vsel %vm1090, %v680, 0
      %v1834 = vsel %vm1090, %v681, 0
      %v1837 = vsel %vm1090, %v682, 0
      %v1840 = vsel %vm1090, %v683, 0
      %v1843 = vsel %vm1090, %v684, 0
      %v1846 = vsel %vm1090, %v685, 0
      %v1849 = vsel %vm1090, %v686, 0
      %v1852 = vsel %vm1090, %v687, 0
      %v1855 = vsel %vm1090, %v688, 0
      %v1858 = vsel %vm1090, %v689, 0
      %1860 = vmatprep.subr.mxu0 0.0
      %1861 = vmatpush1.msra.mxu0 %v690
      %1862 = vmatprep.subr.mxu0 0.0
      %1863 = vmatpush1.msra.mxu0 %v691
      %1864 = vmatprep.subr.mxu0 0.0
      %1865 = vmatpush1.msra.mxu0 %v692
      %1866 = vmatprep.subr.mxu0 0.0
      %1867 = vmatpush1.msra.mxu0 %v693
      %1868 = vmatprep.subr.mxu0 0.0
      %1869 = vmatpush1.msra.mxu0 %v694
      %1870 = vmatprep.subr.mxu0 0.0
      %1871 = vmatpush1.msra.mxu0 %v695
      %1872 = vmatprep.subr.mxu0 0.0
      %1873 = vmatpush1.msra.mxu0 %v696
      %1874 = vmatprep.subr.mxu0 0.0
      %1875 = vmatpush1.msra.mxu0 %v697
      %1876 = vmatprep.subr.mxu0 0.0
      %1877 = vmatpush1.msra.mxu0 0.0
      %1878 = vmatprep.subr.mxu0 0.0
      %1879 = vmatpush1.msra.mxu0 0.0
      %1880 = vmatprep.subr.mxu0 0.0
      %1881 = vmatpush1.msra.mxu0 0.0
      %1882 = vmatprep.subr.mxu0 0.0
      %1883 = vmatpush1.msra.mxu0 0.0
      %1884 = vmatprep.subr.mxu0 0.0
      %1885 = vmatpush1.msra.mxu0 0.0
      %1886 = vmatprep.subr.mxu0 0.0
      %1887 = vmatpush1.msra.mxu0 0.0
      %1888 = vmatprep.subr.mxu0 0.0
      %1889 = vmatpush1.msra.mxu0 0.0
      %1890 = vmatprep.subr.mxu0 0.0
      %1891 = vmatpush1.msra.mxu0 0.0
      %1892 = vmatprep.subr.mxu0 0.0
      %1893 = vmatpush1.msra.mxu0 0.0
      %1894 = vmatprep.subr.mxu0 0.0
      %1895 = vmatpush1.msra.mxu0 0.0
      %1896 = vmatprep.subr.mxu0 0.0
      %1897 = vmatpush1.msra.mxu0 0.0
      %1898 = vmatprep.subr.mxu0 0.0
      %1899 = vmatpush1.msra.mxu0 0.0
      %1900 = vmatprep.subr.mxu0 0.0
      %1901 = vmatpush1.msra.mxu0 0.0
      %1902 = vmatprep.subr.mxu0 0.0
      %1903 = vmatpush1.msra.mxu0 0.0
      %1904 = vmatprep.subr.mxu0 0.0
      %1905 = vmatpush1.msra.mxu0 0.0
      %1906 = vmatprep.subr.mxu0 0.0
      %1907 = vmatpush1.msra.mxu0 0.0
      %1908 = vmatprep.subr.mxu0 0.0
      %1909 = vmatpush1.msra.mxu0 0.0
      %1910 = vmatprep.subr.mxu0 0.0
      %1911 = vmatpush1.msra.mxu0 0.0
      %1912 = vmatprep.subr.mxu0 0.0
      %1913 = vmatpush1.msra.mxu0 0.0
      %1914 = vmatprep.subr.mxu0 0.0
      %1915 = vmatpush1.msra.mxu0 0.0
      %1916 = vmatprep.subr.mxu0 0.0
      %1917 = vmatpush1.msra.mxu0 0.0
      %1918 = vmatprep.subr.mxu0 0.0
      %1919 = vmatpush1.msra.mxu0 0.0
      %1920 = vmatprep.subr.mxu0 0.0
      %1921 = vmatpush1.msra.mxu0 0.0
      %1922 = vmatprep.subr.mxu0 0.0
      %1923 = vmatpush1.msra.mxu0 0.0
      %1924 = vmatprep.mubr.f32.mxu0 0.0
      %1925 = vmatmul.mubr.f32.gmra.mrb[0].mxu0 %v1669
      %v1926 = vpop.f32.mrb[0].mxu0
      %v1927 = vadd.f32 %v1350, %v1926
      %v1928 = vpop.f32.mrb[0].mxu0
      %1929 = vmatprep.mubr.f32.mxu0 0.0
      %1930 = vmatmul.mubr.f32.gmra.mrb[0].mxu0 %v1672
      %v1931 = vpop.f32.mrb[0].mxu0
      %v1932 = vadd.f32 %v1355, %v1931
      %v1933 = vpop.f32.mrb[0].mxu0
      %1934 = vmatprep.mubr.f32.mxu0 0.0
      %1935 = vmatmul.mubr.f32.gmra.mrb[0].mxu0 %v1675
      %v1936 = vpop.f32.mrb[0].mxu0
      %v1937 = vadd.f32 %v1360, %v1936
      %v1938 = vpop.f32.mrb[0].mxu0
      %1939 = vmatprep.mubr.f32.mxu0 0.0
      %1940 = vmatmul.mubr.f32.gmra.mrb[0].mxu0 %v1678
      %v1941 = vpop.f32.mrb[0].mxu0
      %v1942 = vadd.f32 %v1365, %v1941
      %v1943 = vpop.f32.mrb[0].mxu0
      %1944 = vmatprep.mubr.f32.mxu0 0.0
      %1945 = vmatmul.mubr.f32.gmra.mrb[0].mxu0 %v1681
      %v1946 = vpop.f32.mrb[0].mxu0
      %v1947 = vadd.f32 %v1370, %v1946
      %v1948 = vpop.f32.mrb[0].mxu0
      %1949 = vmatprep.mubr.f32.mxu0 0.0
      %1950 = vmatmul.mubr.f32.gmra.mrb[0].mxu0 %v1684
      %v1951 = vpop.f32.mrb[0].mxu0
      %v1952 = vadd.f32 %v1375, %v1951
      %v1953 = vpop.f32.mrb[0].mxu0
      %1954 = vmatprep.mubr.f32.mxu0 0.0
      %1955 = vmatmul.mubr.f32.gmra.mrb[0].mxu0 %v1687
      %v1956 = vpop.f32.mrb[0].mxu0
      %v1957 = vadd.f32 %v1380, %v1956
      %v1958 = vpop.f32.mrb[0].mxu0
      %1959 = vmatprep.mubr.f32.mxu0 0.0
      %1960 = vmatmul.mubr.f32.gmra.mrb[0].mxu0 %v1690
      %v1961 = vpop.f32.mrb[0].mxu0
      %v1962 = vadd.f32 %v1385, %v1961
      %v1963 = vpop.f32.mrb[0].mxu0
      %1964 = vmatprep.mubr.f32.mxu0 0.0
      %1965 = vmatmul.mubr.f32.gmra.mrb[0].mxu0 %v1693
      %v1966 = vpop.f32.mrb[0].mxu0
      %v1967 = vadd.f32 %v1390, %v1966
      %v1968 = vpop.f32.mrb[0].mxu0
      %1969 = vmatprep.mubr.f32.mxu0 0.0
      %1970 = vmatmul.mubr.f32.gmra.mrb[0].mxu0 %v1696
      %v1971 = vpop.f32.mrb[0].mxu0
      %v1972 = vadd.f32 %v1395, %v1971
      %v1973 = vpop.f32.mrb[0].mxu0
      %1974 = vmatprep.mubr.f32.mxu0 0.0
      %1975 = vmatmul.mubr.f32.gmra.mrb[0].mxu0 %v1699
      %v1976 = vpop.f32.mrb[0].mxu0
      %v1977 = vadd.f32 %v1400, %v1976
      %v1978 = vpop.f32.mrb[0].mxu0
      %1979 = vmatprep.mubr.f32.mxu0 0.0
      %1980 = vmatmul.mubr.f32.gmra.mrb[0].mxu0 %v1702
      %v1981 = vpop.f32.mrb[0].mxu0
      %v1982 = vadd.f32 %v1405, %v1981
      %v1983 = vpop.f32.mrb[0].mxu0
      %1984 = vmatprep.mubr.f32.mxu0 0.0
      %1985 = vmatmul.mubr.f32.gmra.mrb[0].mxu0 %v1705
      %v1986 = vpop.f32.mrb[0].mxu0
      %v1987 = vadd.f32 %v1410, %v1986
      %v1988 = vpop.f32.mrb[0].mxu0
      %1989 = vmatprep.mubr.f32.mxu0 0.0
      %1990 = vmatmul.mubr.f32.gmra.mrb[0].mxu0 %v1708
      %v1991 = vpop.f32.mrb[0].mxu0
      %v1992 = vadd.f32 %v1415, %v1991
      %v1993 = vpop.f32.mrb[0].mxu0
      %1994 = vmatprep.mubr.f32.mxu0 0.0
      %1995 = vmatmul.mubr.f32.gmra.mrb[0].mxu0 %v1711
      %v1996 = vpop.f32.mrb[0].mxu0
      %v1997 = vadd.f32 %v1420, %v1996
      %v1998 = vpop.f32.mrb[0].mxu0
      %1999 = vmatprep.mubr.f32.mxu0 0.0
      %2000 = vmatmul.mubr.f32.gmra.mrb[0].mxu0 %v1714
      %v2001 = vpop.f32.mrb[0].mxu0
      %v2002 = vadd.f32 %v1425, %v2001
      %v2003 = vpop.f32.mrb[0].mxu0
      %2004 = vmatprep.mubr.f32.mxu0 0.0
      %2005 = vmatmul.mubr.f32.gmra.mrb[0].mxu0 %v1717
      %v2006 = vpop.f32.mrb[0].mxu0
      %v2007 = vadd.f32 %v1430, %v2006
      %v2008 = vpop.f32.mrb[0].mxu0
      %2009 = vmatprep.mubr.f32.mxu0 0.0
      %2010 = vmatmul.mubr.f32.gmra.mrb[0].mxu0 %v1720
      %v2011 = vpop.f32.mrb[0].mxu0
      %v2012 = vadd.f32 %v1435, %v2011
      %v2013 = vpop.f32.mrb[0].mxu0
      %2014 = vmatprep.mubr.f32.mxu0 0.0
      %2015 = vmatmul.mubr.f32.gmra.mrb[0].mxu0 %v1723
      %v2016 = vpop.f32.mrb[0].mxu0
      %v2017 = vadd.f32 %v1440, %v2016
      %v2018 = vpop.f32.mrb[0].mxu0
      %2019 = vmatprep.mubr.f32.mxu0 0.0
      %2020 = vmatmul.mubr.f32.gmra.mrb[0].mxu0 %v1726
      %v2021 = vpop.f32.mrb[0].mxu0
      %v2022 = vadd.f32 %v1445, %v2021
      %v2023 = vpop.f32.mrb[0].mxu0
      %2024 = vmatprep.mubr.f32.mxu0 0.0
      %2025 = vmatmul.mubr.f32.gmra.mrb[0].mxu0 %v1729
      %v2026 = vpop.f32.mrb[0].mxu0
      %v2027 = vadd.f32 %v1450, %v2026
      %v2028 = vpop.f32.mrb[0].mxu0
      %2029 = vmatprep.mubr.f32.mxu0 0.0
      %2030 = vmatmul.mubr.f32.gmra.mrb[0].mxu0 %v1732
      %v2031 = vpop.f32.mrb[0].mxu0
      %v2032 = vadd.f32 %v1455, %v2031
      %v2033 = vpop.f32.mrb[0].mxu0
      %2034 = vmatprep.mubr.f32.mxu0 0.0
      %2035 = vmatmul.mubr.f32.gmra.mrb[0].mxu0 %v1735
      %v2036 = vpop.f32.mrb[0].mxu0
      %v2037 = vadd.f32 %v1460, %v2036
      %v2038 = vpop.f32.mrb[0].mxu0
      %2039 = vmatprep.mubr.f32.mxu0 0.0
      %2040 = vmatmul.mubr.f32.gmra.mrb[0].mxu0 %v1738
      %v2041 = vpop.f32.mrb[0].mxu0
      %v2042 = vadd.f32 %v1465, %v2041
      %v2043 = vpop.f32.mrb[0].mxu0
      %2044 = vmatprep.mubr.f32.mxu0 0.0
      %2045 = vmatmul.mubr.f32.gmra.mrb[0].mxu0 %v1741
      %v2046 = vpop.f32.mrb[0].mxu0
      %v2047 = vadd.f32 %v1470, %v2046
      %v2048 = vpop.f32.mrb[0].mxu0
      %2049 = vmatprep.mubr.f32.mxu0 0.0
      %2050 = vmatmul.mubr.f32.gmra.mrb[0].mxu0 %v1744
      %v2051 = vpop.f32.mrb[0].mxu0
      %v2052 = vadd.f32 %v1475, %v2051
      %v2053 = vpop.f32.mrb[0].mxu0
      %2054 = vmatprep.mubr.f32.mxu0 0.0
      %2055 = vmatmul.mubr.f32.gmra.mrb[0].mxu0 %v1747
      %v2056 = vpop.f32.mrb[0].mxu0
      %v2057 = vadd.f32 %v1480, %v2056
      %v2058 = vpop.f32.mrb[0].mxu0
      %2059 = vmatprep.mubr.f32.mxu0 0.0
      %2060 = vmatmul.mubr.f32.gmra.mrb[0].mxu0 %v1750
      %v2061 = vpop.f32.mrb[0].mxu0
      %v2062 = vadd.f32 %v1485, %v2061
      %v2063 = vpop.f32.mrb[0].mxu0
      %2064 = vmatprep.mubr.f32.mxu0 0.0
      %2065 = vmatmul.mubr.f32.gmra.mrb[0].mxu0 %v1753
      %v2066 = vpop.f32.mrb[0].mxu0
      %v2067 = vadd.f32 %v1490, %v2066
      %v2068 = vpop.f32.mrb[0].mxu0
      %2069 = vmatprep.mubr.f32.mxu0 0.0
      %2070 = vmatmul.mubr.f32.gmra.mrb[0].mxu0 %v1756
      %v2071 = vpop.f32.mrb[0].mxu0
      %v2072 = vadd.f32 %v1495, %v2071
      %v2073 = vpop.f32.mrb[0].mxu0
      %2074 = vmatprep.mubr.f32.mxu0 0.0
      %2075 = vmatmul.mubr.f32.gmra.mrb[0].mxu0 %v1759
      %v2076 = vpop.f32.mrb[0].mxu0
      %v2077 = vadd.f32 %v1500, %v2076
      %v2078 = vpop.f32.mrb[0].mxu0
      %2079 = vmatprep.mubr.f32.mxu0 0.0
      %2080 = vmatmul.mubr.f32.gmra.mrb[0].mxu0 %v1762
      %v2081 = vpop.f32.mrb[0].mxu0
      %v2082 = vadd.f32 %v1505, %v2081
      %v2083 = vpop.f32.mrb[0].mxu0
      %2084 = vmatprep.mubr.f32.mxu0 0.0
      %2085 = vmatmul.mubr.f32.gmra.mrb[0].mxu0 %v1765
      %v2086 = vpop.f32.mrb[0].mxu0
      %v2087 = vadd.f32 %v1510, %v2086
      %v2088 = vpop.f32.mrb[0].mxu0
      %2089 = vmatprep.mubr.f32.mxu0 0.0
      %2090 = vmatmul.mubr.f32.gmra.mrb[0].mxu0 %v1768
      %v2091 = vpop.f32.mrb[0].mxu0
      %v2092 = vadd.f32 %v1515, %v2091
      %v2093 = vpop.f32.mrb[0].mxu0
      %2094 = vmatprep.mubr.f32.mxu0 0.0
      %2095 = vmatmul.mubr.f32.gmra.mrb[0].mxu0 %v1771
      %v2096 = vpop.f32.mrb[0].mxu0
      %v2097 = vadd.f32 %v1520, %v2096
      %v2098 = vpop.f32.mrb[0].mxu0
      %2099 = vmatprep.mubr.f32.mxu0 0.0
      %2100 = vmatmul.mubr.f32.gmra.mrb[0].mxu0 %v1774
      %v2101 = vpop.f32.mrb[0].mxu0
      %v2102 = vadd.f32 %v1525, %v2101
      %v2103 = vpop.f32.mrb[0].mxu0
      %2104 = vmatprep.mubr.f32.mxu0 0.0
      %2105 = vmatmul.mubr.f32.gmra.mrb[0].mxu0 %v1777
      %v2106 = vpop.f32.mrb[0].mxu0
      %v2107 = vadd.f32 %v1530, %v2106
      %v2108 = vpop.f32.mrb[0].mxu0
      %2109 = vmatprep.mubr.f32.mxu0 0.0
      %2110 = vmatmul.mubr.f32.gmra.mrb[0].mxu0 %v1780
      %v2111 = vpop.f32.mrb[0].mxu0
      %v2112 = vadd.f32 %v1535, %v2111
      %v2113 = vpop.f32.mrb[0].mxu0
      %2114 = vmatprep.mubr.f32.mxu0 0.0
      %2115 = vmatmul.mubr.f32.gmra.mrb[0].mxu0 %v1783
      %v2116 = vpop.f32.mrb[0].mxu0
      %v2117 = vadd.f32 %v1540, %v2116
      %v2118 = vpop.f32.mrb[0].mxu0
      %2119 = vmatprep.mubr.f32.mxu0 0.0
      %2120 = vmatmul.mubr.f32.gmra.mrb[0].mxu0 %v1786
      %v2121 = vpop.f32.mrb[0].mxu0
      %v2122 = vadd.f32 %v1545, %v2121
      %v2123 = vpop.f32.mrb[0].mxu0
      %2124 = vmatprep.mubr.f32.mxu0 0.0
      %2125 = vmatmul.mubr.f32.gmra.mrb[0].mxu0 %v1789
      %v2126 = vpop.f32.mrb[0].mxu0
      %v2127 = vadd.f32 %v1550, %v2126
      %v2128 = vpop.f32.mrb[0].mxu0
      %2129 = vmatprep.mubr.f32.mxu0 0.0
      %2130 = vmatmul.mubr.f32.gmra.mrb[0].mxu0 %v1792
      %v2131 = vpop.f32.mrb[0].mxu0
      %v2132 = vadd.f32 %v1555, %v2131
      %v2133 = vpop.f32.mrb[0].mxu0
      %2134 = vmatprep.mubr.f32.mxu0 0.0
      %2135 = vmatmul.mubr.f32.gmra.mrb[0].mxu0 %v1795
      %v2136 = vpop.f32.mrb[0].mxu0
      %v2137 = vadd.f32 %v1560, %v2136
      %v2138 = vpop.f32.mrb[0].mxu0
      %2139 = vmatprep.mubr.f32.mxu0 0.0
      %2140 = vmatmul.mubr.f32.gmra.mrb[0].mxu0 %v1798
      %v2141 = vpop.f32.mrb[0].mxu0
      %v2142 = vadd.f32 %v1565, %v2141
      %v2143 = vpop.f32.mrb[0].mxu0
      %2144 = vmatprep.mubr.f32.mxu0 0.0
      %2145 = vmatmul.mubr.f32.gmra.mrb[0].mxu0 %v1801
      %v2146 = vpop.f32.mrb[0].mxu0
      %v2147 = vadd.f32 %v1570, %v2146
      %v2148 = vpop.f32.mrb[0].mxu0
      %2149 = vmatprep.mubr.f32.mxu0 0.0
      %2150 = vmatmul.mubr.f32.gmra.mrb[0].mxu0 %v1804
      %v2151 = vpop.f32.mrb[0].mxu0
      %v2152 = vadd.f32 %v1575, %v2151
      %v2153 = vpop.f32.mrb[0].mxu0
      %2154 = vmatprep.mubr.f32.mxu0 0.0
      %2155 = vmatmul.mubr.f32.gmra.mrb[0].mxu0 %v1807
      %v2156 = vpop.f32.mrb[0].mxu0
      %v2157 = vadd.f32 %v1580, %v2156
      %v2158 = vpop.f32.mrb[0].mxu0
      %2159 = vmatprep.mubr.f32.mxu0 0.0
      %2160 = vmatmul.mubr.f32.gmra.mrb[0].mxu0 %v1810
      %v2161 = vpop.f32.mrb[0].mxu0
      %v2162 = vadd.f32 %v1585, %v2161
      %v2163 = vpop.f32.mrb[0].mxu0
      %2164 = vmatprep.mubr.f32.mxu0 0.0
      %2165 = vmatmul.mubr.f32.gmra.mrb[0].mxu0 %v1813
      %v2166 = vpop.f32.mrb[0].mxu0
      %v2167 = vadd.f32 %v1590, %v2166
      %v2168 = vpop.f32.mrb[0].mxu0
      %2169 = vmatprep.mubr.f32.mxu0 0.0
      %2170 = vmatmul.mubr.f32.gmra.mrb[0].mxu0 %v1816
      %v2171 = vpop.f32.mrb[0].mxu0
      %v2172 = vadd.f32 %v1595, %v2171
      %v2173 = vpop.f32.mrb[0].mxu0
      %2174 = vmatprep.mubr.f32.mxu0 0.0
      %2175 = vmatmul.mubr.f32.gmra.mrb[0].mxu0 %v1819
      %v2176 = vpop.f32.mrb[0].mxu0
      %v2177 = vadd.f32 %v1600, %v2176
      %v2178 = vpop.f32.mrb[0].mxu0
      %2179 = vmatprep.mubr.f32.mxu0 0.0
      %2180 = vmatmul.mubr.f32.gmra.mrb[0].mxu0 %v1822
      %v2181 = vpop.f32.mrb[0].mxu0
      %v2182 = vadd.f32 %v1605, %v2181
      %v2183 = vpop.f32.mrb[0].mxu0
      %2184 = vmatprep.mubr.f32.mxu0 0.0
      %2185 = vmatmul.mubr.f32.gmra.mrb[0].mxu0 %v1825
      %v2186 = vpop.f32.mrb[0].mxu0
      %v2187 = vadd.f32 %v1610, %v2186
      %v2188 = vpop.f32.mrb[0].mxu0
      %2189 = vmatprep.mubr.f32.mxu0 0.0
      %2190 = vmatmul.mubr.f32.gmra.mrb[0].mxu0 %v1828
      %v2191 = vpop.f32.mrb[0].mxu0
      %v2192 = vadd.f32 %v1615, %v2191
      %v2193 = vpop.f32.mrb[0].mxu0
      %2194 = vmatprep.mubr.f32.mxu0 0.0
      %2195 = vmatmul.mubr.f32.gmra.mrb[0].mxu0 %v1831
      %v2196 = vpop.f32.mrb[0].mxu0
      %v2197 = vadd.f32 %v1620, %v2196
      %v2198 = vpop.f32.mrb[0].mxu0
      %2199 = vmatprep.mubr.f32.mxu0 0.0
      %2200 = vmatmul.mubr.f32.gmra.mrb[0].mxu0 %v1834
      %v2201 = vpop.f32.mrb[0].mxu0
      %v2202 = vadd.f32 %v1625, %v2201
      %v2203 = vpop.f32.mrb[0].mxu0
      %2204 = vmatprep.mubr.f32.mxu0 0.0
      %2205 = vmatmul.mubr.f32.gmra.mrb[0].mxu0 %v1837
      %v2206 = vpop.f32.mrb[0].mxu0
      %v2207 = vadd.f32 %v1630, %v2206
      %v2208 = vpop.f32.mrb[0].mxu0
      %2209 = vmatprep.mubr.f32.mxu0 0.0
      %2210 = vmatmul.mubr.f32.gmra.mrb[0].mxu0 %v1840
      %v2211 = vpop.f32.mrb[0].mxu0
      %v2212 = vadd.f32 %v1635, %v2211
      %v2213 = vpop.f32.mrb[0].mxu0
      %2214 = vmatprep.mubr.f32.mxu0 0.0
      %2215 = vmatmul.mubr.f32.gmra.mrb[0].mxu0 %v1843
      %v2216 = vpop.f32.mrb[0].mxu0
      %v2217 = vadd.f32 %v1640, %v2216
      %v2218 = vpop.f32.mrb[0].mxu0
      %2219 = vmatprep.mubr.f32.mxu0 0.0
      %2220 = vmatmul.mubr.f32.gmra.mrb[0].mxu0 %v1846
      %v2221 = vpop.f32.mrb[0].mxu0
      %v2222 = vadd.f32 %v1645, %v2221
      %v2223 = vpop.f32.mrb[0].mxu0
      %2224 = vmatprep.mubr.f32.mxu0 0.0
      %2225 = vmatmul.mubr.f32.gmra.mrb[0].mxu0 %v1849
      %v2226 = vpop.f32.mrb[0].mxu0
      %v2227 = vadd.f32 %v1650, %v2226
      %v2228 = vpop.f32.mrb[0].mxu0
      %2229 = vmatprep.mubr.f32.mxu0 0.0
      %2230 = vmatmul.mubr.f32.gmra.mrb[0].mxu0 %v1852
      %v2231 = vpop.f32.mrb[0].mxu0
      %v2232 = vadd.f32 %v1655, %v2231
      %v2233 = vpop.f32.mrb[0].mxu0
      %2234 = vmatprep.mubr.f32.mxu0 0.0
      %2235 = vmatmul.mubr.f32.gmra.mrb[0].mxu0 %v1855
      %v2236 = vpop.f32.mrb[0].mxu0
      %v2237 = vadd.f32 %v1660, %v2236
      %v2238 = vpop.f32.mrb[0].mxu0
      %2239 = vmatprep.mubr.f32.mxu0 0.0
      %2240 = vmatmul.mubr.f32.gmra.mrb[0].mxu0 %v1858
      %v2241 = vpop.f32.mrb[0].mxu0
      %v2242 = vadd.f32 %v1665, %v2241
      %v2243 = vpop.f32.mrb[0].mxu0
      %2244 = vdwg.mxu0
      %v2245 = vld [vmem:[%s4] sm:$0x1]
      %v2247 = vlaneseq
      %v2248 = vshrl.u32 %v2247, 7
      %v2249 = vsub.s32 0, %v2248
      %v2250 = vrot.slane %v2245, %v2249
      %v2252 = vadd.f32 %v1927, %v2250
      %v2253 = vadd.f32 %v1932, %v2250
      %v2254 = vadd.f32 %v1937, %v2250
      %v2255 = vadd.f32 %v1942, %v2250
      %v2256 = vadd.f32 %v1947, %v2250
      %v2257 = vadd.f32 %v1952, %v2250
      %v2258 = vadd.f32 %v1957, %v2250
      %v2259 = vadd.f32 %v1962, %v2250
      %v2260 = vadd.f32 %v1967, %v2250
      %v2261 = vadd.f32 %v1972, %v2250
      %v2262 = vadd.f32 %v1977, %v2250
      %v2263 = vadd.f32 %v1982, %v2250
      %v2264 = vadd.f32 %v1987, %v2250
      %v2265 = vadd.f32 %v1992, %v2250
      %v2266 = vadd.f32 %v1997, %v2250
      %v2267 = vadd.f32 %v2002, %v2250
      %v2268 = vadd.f32 %v2007, %v2250
      %v2269 = vadd.f32 %v2012, %v2250
      %v2270 = vadd.f32 %v2017, %v2250
      %v2271 = vadd.f32 %v2022, %v2250
      %v2272 = vadd.f32 %v2027, %v2250
      %v2273 = vadd.f32 %v2032, %v2250
      %v2274 = vadd.f32 %v2037, %v2250
      %v2275 = vadd.f32 %v2042, %v2250
      %v2276 = vadd.f32 %v2047, %v2250
      %v2277 = vadd.f32 %v2052, %v2250
      %v2278 = vadd.f32 %v2057, %v2250
      %v2279 = vadd.f32 %v2062, %v2250
      %v2280 = vadd.f32 %v2067, %v2250
      %v2281 = vadd.f32 %v2072, %v2250
      %v2282 = vadd.f32 %v2077, %v2250
      %v2283 = vadd.f32 %v2082, %v2250
      %v2284 = vadd.f32 %v2087, %v2250
      %v2285 = vadd.f32 %v2092, %v2250
      %v2286 = vadd.f32 %v2097, %v2250
      %v2287 = vadd.f32 %v2102, %v2250
      %v2288 = vadd.f32 %v2107, %v2250
      %v2289 = vadd.f32 %v2112, %v2250
      %v2290 = vadd.f32 %v2117, %v2250
      %v2291 = vadd.f32 %v2122, %v2250
      %v2292 = vadd.f32 %v2127, %v2250
      %v2293 = vadd.f32 %v2132, %v2250
      %v2294 = vadd.f32 %v2137, %v2250
      %v2295 = vadd.f32 %v2142, %v2250
      %v2296 = vadd.f32 %v2147, %v2250
      %v2297 = vadd.f32 %v2152, %v2250
      %v2298 = vadd.f32 %v2157, %v2250
      %v2299 = vadd.f32 %v2162, %v2250
      %v2300 = vadd.f32 %v2167, %v2250
      %v2301 = vadd.f32 %v2172, %v2250
      %v2302 = vadd.f32 %v2177, %v2250
      %v2303 = vadd.f32 %v2182, %v2250
      %v2304 = vadd.f32 %v2187, %v2250
      %v2305 = vadd.f32 %v2192, %v2250
      %v2306 = vadd.f32 %v2197, %v2250
      %v2307 = vadd.f32 %v2202, %v2250
      %v2308 = vadd.f32 %v2207, %v2250
      %v2309 = vadd.f32 %v2212, %v2250
      %v2310 = vadd.f32 %v2217, %v2250
      %v2311 = vadd.f32 %v2222, %v2250
      %v2312 = vadd.f32 %v2227, %v2250
      %v2313 = vadd.f32 %v2232, %v2250
      %v2314 = vadd.f32 %v2237, %v2250
      %v2315 = vadd.f32 %v2242, %v2250
      %v2316 = vmax.f32 %v2252, 0.0
      %v2317 = vmax.f32 %v2253, 0.0
      %v2318 = vmax.f32 %v2254, 0.0
      %v2319 = vmax.f32 %v2255, 0.0
      %v2320 = vmax.f32 %v2256, 0.0
      %v2321 = vmax.f32 %v2257, 0.0
      %v2322 = vmax.f32 %v2258, 0.0
      %v2323 = vmax.f32 %v2259, 0.0
      %v2324 = vmax.f32 %v2260, 0.0
      %v2325 = vmax.f32 %v2261, 0.0
      %v2326 = vmax.f32 %v2262, 0.0
      %v2327 = vmax.f32 %v2263, 0.0
      %v2328 = vmax.f32 %v2264, 0.0
      %v2329 = vmax.f32 %v2265, 0.0
      %v2330 = vmax.f32 %v2266, 0.0
      %v2331 = vmax.f32 %v2267, 0.0
      %v2332 = vmax.f32 %v2268, 0.0
      %v2333 = vmax.f32 %v2269, 0.0
      %v2334 = vmax.f32 %v2270, 0.0
      %v2335 = vmax.f32 %v2271, 0.0
      %v2336 = vmax.f32 %v2272, 0.0
      %v2337 = vmax.f32 %v2273, 0.0
      %v2338 = vmax.f32 %v2274, 0.0
      %v2339 = vmax.f32 %v2275, 0.0
      %v2340 = vmax.f32 %v2276, 0.0
      %v2341 = vmax.f32 %v2277, 0.0
      %v2342 = vmax.f32 %v2278, 0.0
      %v2343 = vmax.f32 %v2279, 0.0
      %v2344 = vmax.f32 %v2280, 0.0
      %v2345 = vmax.f32 %v2281, 0.0
      %v2346 = vmax.f32 %v2282, 0.0
      %v2347 = vmax.f32 %v2283, 0.0
      %v2348 = vmax.f32 %v2284, 0.0
      %v2349 = vmax.f32 %v2285, 0.0
      %v2350 = vmax.f32 %v2286, 0.0
      %v2351 = vmax.f32 %v2287, 0.0
      %v2352 = vmax.f32 %v2288, 0.0
      %v2353 = vmax.f32 %v2289, 0.0
      %v2354 = vmax.f32 %v2290, 0.0
      %v2355 = vmax.f32 %v2291, 0.0
      %v2356 = vmax.f32 %v2292, 0.0
      %v2357 = vmax.f32 %v2293, 0.0
      %v2358 = vmax.f32 %v2294, 0.0
      %v2359 = vmax.f32 %v2295, 0.0
      %v2360 = vmax.f32 %v2296, 0.0
      %v2361 = vmax.f32 %v2297, 0.0
      %v2362 = vmax.f32 %v2298, 0.0
      %v2363 = vmax.f32 %v2299, 0.0
      %v2364 = vmax.f32 %v2300, 0.0
      %v2365 = vmax.f32 %v2301, 0.0
      %v2366 = vmax.f32 %v2302, 0.0
      %v2367 = vmax.f32 %v2303, 0.0
      %v2368 = vmax.f32 %v2304, 0.0
      %v2369 = vmax.f32 %v2305, 0.0
      %v2370 = vmax.f32 %v2306, 0.0
      %v2371 = vmax.f32 %v2307, 0.0
      %v2372 = vmax.f32 %v2308, 0.0
      %v2373 = vmax.f32 %v2309, 0.0
      %v2374 = vmax.f32 %v2310, 0.0
      %v2375 = vmax.f32 %v2311, 0.0
      %v2376 = vmax.f32 %v2312, 0.0
      %v2377 = vmax.f32 %v2313, 0.0
      %v2378 = vmax.f32 %v2314, 0.0
      %v2379 = vmax.f32 %v2315, 0.0
      %v2380 = vld [vmem:[%s5] sm:$0xff]
      %v2381 = vld [vmem:[%s5 + $0x8] sm:$0xff]
      %v2382 = vld [vmem:[%s5 + $0x10] sm:$0xff]
      %v2383 = vld [vmem:[%s5 + $0x18] sm:$0xff]
      %v2384 = vld [vmem:[%s6] sm:$0x1]
      %v2386 = vlaneseq
      %v2387 = vshrl.u32 %v2386, 7
      %v2388 = vsub.s32 0, %v2387
      %v2389 = vrot.slane %v2384, %v2388
      %vm2391 = vcmask 261120
      %v2393 = vsel %vm2391, %v2316, 0
      %v2396 = vsel %vm2391, %v2317, 0
      %v2399 = vsel %vm2391, %v2318, 0
      %v2402 = vsel %vm2391, %v2319, 0
      %v2405 = vsel %vm2391, %v2320, 0
      %v2408 = vsel %vm2391, %v2321, 0
      %v2411 = vsel %vm2391, %v2322, 0
      %v2414 = vsel %vm2391, %v2323, 0
      %v2417 = vsel %vm2391, %v2324, 0
      %v2420 = vsel %vm2391, %v2325, 0
      %v2423 = vsel %vm2391, %v2326, 0
      %v2426 = vsel %vm2391, %v2327, 0
      %v2429 = vsel %vm2391, %v2328, 0
      %v2432 = vsel %vm2391, %v2329, 0
      %v2435 = vsel %vm2391, %v2330, 0
      %v2438 = vsel %vm2391, %v2331, 0
      %v2441 = vsel %vm2391, %v2332, 0
      %v2444 = vsel %vm2391, %v2333, 0
      %v2447 = vsel %vm2391, %v2334, 0
      %v2450 = vsel %vm2391, %v2335, 0
      %v2453 = vsel %vm2391, %v2336, 0
      %v2456 = vsel %vm2391, %v2337, 0
      %v2459 = vsel %vm2391, %v2338, 0
      %v2462 = vsel %vm2391, %v2339, 0
      %v2465 = vsel %vm2391, %v2340, 0
      %v2468 = vsel %vm2391, %v2341, 0
      %v2471 = vsel %vm2391, %v2342, 0
      %v2474 = vsel %vm2391, %v2343, 0
      %v2477 = vsel %vm2391, %v2344, 0
      %v2480 = vsel %vm2391, %v2345, 0
      %v2483 = vsel %vm2391, %v2346, 0
      %v2486 = vsel %vm2391, %v2347, 0
      %v2489 = vsel %vm2391, %v2348, 0
      %v2492 = vsel %vm2391, %v2349, 0
      %v2495 = vsel %vm2391, %v2350, 0
      %v2498 = vsel %vm2391, %v2351, 0
      %v2501 = vsel %vm2391, %v2352, 0
      %v2504 = vsel %vm2391, %v2353, 0
      %v2507 = vsel %vm2391, %v2354, 0
      %v2510 = vsel %vm2391, %v2355, 0
      %v2513 = vsel %vm2391, %v2356, 0
      %v2516 = vsel %vm2391, %v2357, 0
      %v2519 = vsel %vm2391, %v2358, 0
      %v2522 = vsel %vm2391, %v2359, 0
      %v2525 = vsel %vm2391, %v2360, 0
      %v2528 = vsel %vm2391, %v2361, 0
      %v2531 = vsel %vm2391, %v2362, 0
      %v2534 = vsel %vm2391, %v2363, 0
      %v2537 = vsel %vm2391, %v2364, 0
      %v2540 = vsel %vm2391, %v2365, 0
      %v2543 = vsel %vm2391, %v2366, 0
      %v2546 = vsel %vm2391, %v2367, 0
      %v2549 = vsel %vm2391, %v2368, 0
      %v2552 = vsel %vm2391, %v2369, 0
      %v2555 = vsel %vm2391, %v2370, 0
      %v2558 = vsel %vm2391, %v2371, 0
      %v2561 = vsel %vm2391, %v2372, 0
      %v2564 = vsel %vm2391, %v2373, 0
      %v2567 = vsel %vm2391, %v2374, 0
      %v2570 = vsel %vm2391, %v2375, 0
      %v2573 = vsel %vm2391, %v2376, 0
      %v2576 = vsel %vm2391, %v2377, 0
      %v2579 = vsel %vm2391, %v2378, 0
      %v2582 = vsel %vm2391, %v2379, 0
      %2584 = vmatprep.subr.mxu0 0.0
      %2585 = vmatpush1.msra.mxu0 %v2380
      %2586 = vmatprep.subr.mxu0 0.0
      %2587 = vmatpush1.msra.mxu0 %v2381
      %2588 = vmatprep.subr.mxu0 0.0
      %2589 = vmatpush1.msra.mxu0 %v2382
      %2590 = vmatprep.subr.mxu0 0.0
      %2591 = vmatpush1.msra.mxu0 %v2383
      %2592 = vmatprep.subr.mxu0 0.0
      %2593 = vmatpush1.msra.mxu0 0.0
      %2594 = vmatprep.subr.mxu0 0.0
      %2595 = vmatpush1.msra.mxu0 0.0
      %2596 = vmatprep.subr.mxu0 0.0
      %2597 = vmatpush1.msra.mxu0 0.0
      %2598 = vmatprep.subr.mxu0 0.0
      %2599 = vmatpush1.msra.mxu0 0.0
      %2600 = vmatprep.subr.mxu0 0.0
      %2601 = vmatpush1.msra.mxu0 0.0
      %2602 = vmatprep.subr.mxu0 0.0
      %2603 = vmatpush1.msra.mxu0 0.0
      %2604 = vmatprep.subr.mxu0 0.0
      %2605 = vmatpush1.msra.mxu0 0.0
      %2606 = vmatprep.subr.mxu0 0.0
      %2607 = vmatpush1.msra.mxu0 0.0
      %2608 = vmatprep.subr.mxu0 0.0
      %2609 = vmatpush1.msra.mxu0 0.0
      %2610 = vmatprep.subr.mxu0 0.0
      %2611 = vmatpush1.msra.mxu0 0.0
      %2612 = vmatprep.subr.mxu0 0.0
      %2613 = vmatpush1.msra.mxu0 0.0
      %2614 = vmatprep.subr.mxu0 0.0
      %2615 = vmatpush1.msra.mxu0 0.0
      %2616 = vmatprep.subr.mxu0 0.0
      %2617 = vmatpush1.msra.mxu0 0.0
      %2618 = vmatprep.subr.mxu0 0.0
      %2619 = vmatpush1.msra.mxu0 0.0
      %2620 = vmatprep.subr.mxu0 0.0
      %2621 = vmatpush1.msra.mxu0 0.0
      %2622 = vmatprep.subr.mxu0 0.0
      %2623 = vmatpush1.msra.mxu0 0.0
      %2624 = vmatprep.subr.mxu0 0.0
      %2625 = vmatpush1.msra.mxu0 0.0
      %2626 = vmatprep.subr.mxu0 0.0
      %2627 = vmatpush1.msra.mxu0 0.0
      %2628 = vmatprep.subr.mxu0 0.0
      %2629 = vmatpush1.msra.mxu0 0.0
      %2630 = vmatprep.subr.mxu0 0.0
      %2631 = vmatpush1.msra.mxu0 0.0
      %2632 = vmatprep.subr.mxu0 0.0
      %2633 = vmatpush1.msra.mxu0 0.0
      %2634 = vmatprep.subr.mxu0 0.0
      %2635 = vmatpush1.msra.mxu0 0.0
      %2636 = vmatprep.subr.mxu0 0.0
      %2637 = vmatpush1.msra.mxu0 0.0
      %2638 = vmatprep.subr.mxu0 0.0
      %2639 = vmatpush1.msra.mxu0 0.0
      %2640 = vmatprep.subr.mxu0 0.0
      %2641 = vmatpush1.msra.mxu0 0.0
      %2642 = vmatprep.subr.mxu0 0.0
      %2643 = vmatpush1.msra.mxu0 0.0
      %2644 = vmatprep.subr.mxu0 0.0
      %2645 = vmatpush1.msra.mxu0 0.0
      %2646 = vmatprep.subr.mxu0 0.0
      %2647 = vmatpush1.msra.mxu0 0.0
      %2648 = vmatprep.mubr.f32.mxu0 0.0
      %2649 = vmatmul.mubr.f32.gmra.mrb[0].mxu0 %v2393
      %v2650 = vpop.f32.mrb[0].mxu0
      %v2651 = vadd.f32 %v2389, %v2650
      %v2652 = vpop.f32.mrb[0].mxu0
      %2653 = vmatprep.mubr.f32.mxu0 0.0
      %2654 = vmatmul.mubr.f32.gmra.mrb[0].mxu0 %v2396
      %v2655 = vpop.f32.mrb[0].mxu0
      %v2656 = vadd.f32 %v2389, %v2655
      %v2657 = vpop.f32.mrb[0].mxu0
      %2658 = vmatprep.mubr.f32.mxu0 0.0
      %2659 = vmatmul.mubr.f32.gmra.mrb[0].mxu0 %v2399
      %v2660 = vpop.f32.mrb[0].mxu0
      %v2661 = vadd.f32 %v2389, %v2660
      %v2662 = vpop.f32.mrb[0].mxu0
      %2663 = vmatprep.mubr.f32.mxu0 0.0
      %2664 = vmatmul.mubr.f32.gmra.mrb[0].mxu0 %v2402
      %v2665 = vpop.f32.mrb[0].mxu0
      %v2666 = vadd.f32 %v2389, %v2665
      %v2667 = vpop.f32.mrb[0].mxu0
      %2668 = vmatprep.mubr.f32.mxu0 0.0
      %2669 = vmatmul.mubr.f32.gmra.mrb[0].mxu0 %v2405
      %v2670 = vpop.f32.mrb[0].mxu0
      %v2671 = vadd.f32 %v2389, %v2670
      %v2672 = vpop.f32.mrb[0].mxu0
      %2673 = vmatprep.mubr.f32.mxu0 0.0
      %2674 = vmatmul.mubr.f32.gmra.mrb[0].mxu0 %v2408
      %v2675 = vpop.f32.mrb[0].mxu0
      %v2676 = vadd.f32 %v2389, %v2675
      %v2677 = vpop.f32.mrb[0].mxu0
      %2678 = vmatprep.mubr.f32.mxu0 0.0
      %2679 = vmatmul.mubr.f32.gmra.mrb[0].mxu0 %v2411
      %v2680 = vpop.f32.mrb[0].mxu0
      %v2681 = vadd.f32 %v2389, %v2680
      %v2682 = vpop.f32.mrb[0].mxu0
      %2683 = vmatprep.mubr.f32.mxu0 0.0
      %2684 = vmatmul.mubr.f32.gmra.mrb[0].mxu0 %v2414
      %v2685 = vpop.f32.mrb[0].mxu0
      %v2686 = vadd.f32 %v2389, %v2685
      %v2687 = vpop.f32.mrb[0].mxu0
      %2688 = vmatprep.mubr.f32.mxu0 0.0
      %2689 = vmatmul.mubr.f32.gmra.mrb[0].mxu0 %v2417
      %v2690 = vpop.f32.mrb[0].mxu0
      %v2691 = vadd.f32 %v2389, %v2690
      %v2692 = vpop.f32.mrb[0].mxu0
      %2693 = vmatprep.mubr.f32.mxu0 0.0
      %2694 = vmatmul.mubr.f32.gmra.mrb[0].mxu0 %v2420
      %v2695 = vpop.f32.mrb[0].mxu0
      %v2696 = vadd.f32 %v2389, %v2695
      %v2697 = vpop.f32.mrb[0].mxu0
      %2698 = vmatprep.mubr.f32.mxu0 0.0
      %2699 = vmatmul.mubr.f32.gmra.mrb[0].mxu0 %v2423
      %v2700 = vpop.f32.mrb[0].mxu0
      %v2701 = vadd.f32 %v2389, %v2700
      %v2702 = vpop.f32.mrb[0].mxu0
      %2703 = vmatprep.mubr.f32.mxu0 0.0
      %2704 = vmatmul.mubr.f32.gmra.mrb[0].mxu0 %v2426
      %v2705 = vpop.f32.mrb[0].mxu0
      %v2706 = vadd.f32 %v2389, %v2705
      %v2707 = vpop.f32.mrb[0].mxu0
      %2708 = vmatprep.mubr.f32.mxu0 0.0
      %2709 = vmatmul.mubr.f32.gmra.mrb[0].mxu0 %v2429
      %v2710 = vpop.f32.mrb[0].mxu0
      %v2711 = vadd.f32 %v2389, %v2710
      %v2712 = vpop.f32.mrb[0].mxu0
      %2713 = vmatprep.mubr.f32.mxu0 0.0
      %2714 = vmatmul.mubr.f32.gmra.mrb[0].mxu0 %v2432
      %v2715 = vpop.f32.mrb[0].mxu0
      %v2716 = vadd.f32 %v2389, %v2715
      %v2717 = vpop.f32.mrb[0].mxu0
      %2718 = vmatprep.mubr.f32.mxu0 0.0
      %2719 = vmatmul.mubr.f32.gmra.mrb[0].mxu0 %v2435
      %v2720 = vpop.f32.mrb[0].mxu0
      %v2721 = vadd.f32 %v2389, %v2720
      %v2722 = vpop.f32.mrb[0].mxu0
      %2723 = vmatprep.mubr.f32.mxu0 0.0
      %2724 = vmatmul.mubr.f32.gmra.mrb[0].mxu0 %v2438
      %v2725 = vpop.f32.mrb[0].mxu0
      %v2726 = vadd.f32 %v2389, %v2725
      %v2727 = vpop.f32.mrb[0].mxu0
      %2728 = vmatprep.mubr.f32.mxu0 0.0
      %2729 = vmatmul.mubr.f32.gmra.mrb[0].mxu0 %v2441
      %v2730 = vpop.f32.mrb[0].mxu0
      %v2731 = vadd.f32 %v2389, %v2730
      %v2732 = vpop.f32.mrb[0].mxu0
      %2733 = vmatprep.mubr.f32.mxu0 0.0
      %2734 = vmatmul.mubr.f32.gmra.mrb[0].mxu0 %v2444
      %v2735 = vpop.f32.mrb[0].mxu0
      %v2736 = vadd.f32 %v2389, %v2735
      %v2737 = vpop.f32.mrb[0].mxu0
      %2738 = vmatprep.mubr.f32.mxu0 0.0
      %2739 = vmatmul.mubr.f32.gmra.mrb[0].mxu0 %v2447
      %v2740 = vpop.f32.mrb[0].mxu0
      %v2741 = vadd.f32 %v2389, %v2740
      %v2742 = vpop.f32.mrb[0].mxu0
      %2743 = vmatprep.mubr.f32.mxu0 0.0
      %2744 = vmatmul.mubr.f32.gmra.mrb[0].mxu0 %v2450
      %v2745 = vpop.f32.mrb[0].mxu0
      %v2746 = vadd.f32 %v2389, %v2745
      %v2747 = vpop.f32.mrb[0].mxu0
      %2748 = vmatprep.mubr.f32.mxu0 0.0
      %2749 = vmatmul.mubr.f32.gmra.mrb[0].mxu0 %v2453
      %v2750 = vpop.f32.mrb[0].mxu0
      %v2751 = vadd.f32 %v2389, %v2750
      %v2752 = vpop.f32.mrb[0].mxu0
      %2753 = vmatprep.mubr.f32.mxu0 0.0
      %2754 = vmatmul.mubr.f32.gmra.mrb[0].mxu0 %v2456
      %v2755 = vpop.f32.mrb[0].mxu0
      %v2756 = vadd.f32 %v2389, %v2755
      %v2757 = vpop.f32.mrb[0].mxu0
      %2758 = vmatprep.mubr.f32.mxu0 0.0
      %2759 = vmatmul.mubr.f32.gmra.mrb[0].mxu0 %v2459
      %v2760 = vpop.f32.mrb[0].mxu0
      %v2761 = vadd.f32 %v2389, %v2760
      %v2762 = vpop.f32.mrb[0].mxu0
      %2763 = vmatprep.mubr.f32.mxu0 0.0
      %2764 = vmatmul.mubr.f32.gmra.mrb[0].mxu0 %v2462
      %v2765 = vpop.f32.mrb[0].mxu0
      %v2766 = vadd.f32 %v2389, %v2765
      %v2767 = vpop.f32.mrb[0].mxu0
      %2768 = vmatprep.mubr.f32.mxu0 0.0
      %2769 = vmatmul.mubr.f32.gmra.mrb[0].mxu0 %v2465
      %v2770 = vpop.f32.mrb[0].mxu0
      %v2771 = vadd.f32 %v2389, %v2770
      %v2772 = vpop.f32.mrb[0].mxu0
      %2773 = vmatprep.mubr.f32.mxu0 0.0
      %2774 = vmatmul.mubr.f32.gmra.mrb[0].mxu0 %v2468
      %v2775 = vpop.f32.mrb[0].mxu0
      %v2776 = vadd.f32 %v2389, %v2775
      %v2777 = vpop.f32.mrb[0].mxu0
      %2778 = vmatprep.mubr.f32.mxu0 0.0
      %2779 = vmatmul.mubr.f32.gmra.mrb[0].mxu0 %v2471
      %v2780 = vpop.f32.mrb[0].mxu0
      %v2781 = vadd.f32 %v2389, %v2780
      %v2782 = vpop.f32.mrb[0].mxu0
      %2783 = vmatprep.mubr.f32.mxu0 0.0
      %2784 = vmatmul.mubr.f32.gmra.mrb[0].mxu0 %v2474
      %v2785 = vpop.f32.mrb[0].mxu0
      %v2786 = vadd.f32 %v2389, %v2785
      %v2787 = vpop.f32.mrb[0].mxu0
      %2788 = vmatprep.mubr.f32.mxu0 0.0
      %2789 = vmatmul.mubr.f32.gmra.mrb[0].mxu0 %v2477
      %v2790 = vpop.f32.mrb[0].mxu0
      %v2791 = vadd.f32 %v2389, %v2790
      %v2792 = vpop.f32.mrb[0].mxu0
      %2793 = vmatprep.mubr.f32.mxu0 0.0
      %2794 = vmatmul.mubr.f32.gmra.mrb[0].mxu0 %v2480
      %v2795 = vpop.f32.mrb[0].mxu0
      %v2796 = vadd.f32 %v2389, %v2795
      %v2797 = vpop.f32.mrb[0].mxu0
      %2798 = vmatprep.mubr.f32.mxu0 0.0
      %2799 = vmatmul.mubr.f32.gmra.mrb[0].mxu0 %v2483
      %v2800 = vpop.f32.mrb[0].mxu0
      %v2801 = vadd.f32 %v2389, %v2800
      %v2802 = vpop.f32.mrb[0].mxu0
      %2803 = vmatprep.mubr.f32.mxu0 0.0
      %2804 = vmatmul.mubr.f32.gmra.mrb[0].mxu0 %v2486
      %v2805 = vpop.f32.mrb[0].mxu0
      %v2806 = vadd.f32 %v2389, %v2805
      %v2807 = vpop.f32.mrb[0].mxu0
      %2808 = vmatprep.mubr.f32.mxu0 0.0
      %2809 = vmatmul.mubr.f32.gmra.mrb[0].mxu0 %v2489
      %v2810 = vpop.f32.mrb[0].mxu0
      %v2811 = vadd.f32 %v2389, %v2810
      %v2812 = vpop.f32.mrb[0].mxu0
      %2813 = vmatprep.mubr.f32.mxu0 0.0
      %2814 = vmatmul.mubr.f32.gmra.mrb[0].mxu0 %v2492
      %v2815 = vpop.f32.mrb[0].mxu0
      %v2816 = vadd.f32 %v2389, %v2815
      %v2817 = vpop.f32.mrb[0].mxu0
      %2818 = vmatprep.mubr.f32.mxu0 0.0
      %2819 = vmatmul.mubr.f32.gmra.mrb[0].mxu0 %v2495
      %v2820 = vpop.f32.mrb[0].mxu0
      %v2821 = vadd.f32 %v2389, %v2820
      %v2822 = vpop.f32.mrb[0].mxu0
      %2823 = vmatprep.mubr.f32.mxu0 0.0
      %2824 = vmatmul.mubr.f32.gmra.mrb[0].mxu0 %v2498
      %v2825 = vpop.f32.mrb[0].mxu0
      %v2826 = vadd.f32 %v2389, %v2825
      %v2827 = vpop.f32.mrb[0].mxu0
      %2828 = vmatprep.mubr.f32.mxu0 0.0
      %2829 = vmatmul.mubr.f32.gmra.mrb[0].mxu0 %v2501
      %v2830 = vpop.f32.mrb[0].mxu0
      %v2831 = vadd.f32 %v2389, %v2830
      %v2832 = vpop.f32.mrb[0].mxu0
      %2833 = vmatprep.mubr.f32.mxu0 0.0
      %2834 = vmatmul.mubr.f32.gmra.mrb[0].mxu0 %v2504
      %v2835 = vpop.f32.mrb[0].mxu0
      %v2836 = vadd.f32 %v2389, %v2835
      %v2837 = vpop.f32.mrb[0].mxu0
      %2838 = vmatprep.mubr.f32.mxu0 0.0
      %2839 = vmatmul.mubr.f32.gmra.mrb[0].mxu0 %v2507
      %v2840 = vpop.f32.mrb[0].mxu0
      %v2841 = vadd.f32 %v2389, %v2840
      %v2842 = vpop.f32.mrb[0].mxu0
      %2843 = vmatprep.mubr.f32.mxu0 0.0
      %2844 = vmatmul.mubr.f32.gmra.mrb[0].mxu0 %v2510
      %v2845 = vpop.f32.mrb[0].mxu0
      %v2846 = vadd.f32 %v2389, %v2845
      %v2847 = vpop.f32.mrb[0].mxu0
      %2848 = vmatprep.mubr.f32.mxu0 0.0
      %2849 = vmatmul.mubr.f32.gmra.mrb[0].mxu0 %v2513
      %v2850 = vpop.f32.mrb[0].mxu0
      %v2851 = vadd.f32 %v2389, %v2850
      %v2852 = vpop.f32.mrb[0].mxu0
      %2853 = vmatprep.mubr.f32.mxu0 0.0
      %2854 = vmatmul.mubr.f32.gmra.mrb[0].mxu0 %v2516
      %v2855 = vpop.f32.mrb[0].mxu0
      %v2856 = vadd.f32 %v2389, %v2855
      %v2857 = vpop.f32.mrb[0].mxu0
      %2858 = vmatprep.mubr.f32.mxu0 0.0
      %2859 = vmatmul.mubr.f32.gmra.mrb[0].mxu0 %v2519
      %v2860 = vpop.f32.mrb[0].mxu0
      %v2861 = vadd.f32 %v2389, %v2860
      %v2862 = vpop.f32.mrb[0].mxu0
      %2863 = vmatprep.mubr.f32.mxu0 0.0
      %2864 = vmatmul.mubr.f32.gmra.mrb[0].mxu0 %v2522
      %v2865 = vpop.f32.mrb[0].mxu0
      %v2866 = vadd.f32 %v2389, %v2865
      %v2867 = vpop.f32.mrb[0].mxu0
      %2868 = vmatprep.mubr.f32.mxu0 0.0
      %2869 = vmatmul.mubr.f32.gmra.mrb[0].mxu0 %v2525
      %v2870 = vpop.f32.mrb[0].mxu0
      %v2871 = vadd.f32 %v2389, %v2870
      %v2872 = vpop.f32.mrb[0].mxu0
      %2873 = vmatprep.mubr.f32.mxu0 0.0
      %2874 = vmatmul.mubr.f32.gmra.mrb[0].mxu0 %v2528
      %v2875 = vpop.f32.mrb[0].mxu0
      %v2876 = vadd.f32 %v2389, %v2875
      %v2877 = vpop.f32.mrb[0].mxu0
      %2878 = vmatprep.mubr.f32.mxu0 0.0
      %2879 = vmatmul.mubr.f32.gmra.mrb[0].mxu0 %v2531
      %v2880 = vpop.f32.mrb[0].mxu0
      %v2881 = vadd.f32 %v2389, %v2880
      %v2882 = vpop.f32.mrb[0].mxu0
      %2883 = vmatprep.mubr.f32.mxu0 0.0
      %2884 = vmatmul.mubr.f32.gmra.mrb[0].mxu0 %v2534
      %v2885 = vpop.f32.mrb[0].mxu0
      %v2886 = vadd.f32 %v2389, %v2885
      %v2887 = vpop.f32.mrb[0].mxu0
      %2888 = vmatprep.mubr.f32.mxu0 0.0
      %2889 = vmatmul.mubr.f32.gmra.mrb[0].mxu0 %v2537
      %v2890 = vpop.f32.mrb[0].mxu0
      %v2891 = vadd.f32 %v2389, %v2890
      %v2892 = vpop.f32.mrb[0].mxu0
      %2893 = vmatprep.mubr.f32.mxu0 0.0
      %2894 = vmatmul.mubr.f32.gmra.mrb[0].mxu0 %v2540
      %v2895 = vpop.f32.mrb[0].mxu0
      %v2896 = vadd.f32 %v2389, %v2895
      %v2897 = vpop.f32.mrb[0].mxu0
      %2898 = vmatprep.mubr.f32.mxu0 0.0
      %2899 = vmatmul.mubr.f32.gmra.mrb[0].mxu0 %v2543
      %v2900 = vpop.f32.mrb[0].mxu0
      %v2901 = vadd.f32 %v2389, %v2900
      %v2902 = vpop.f32.mrb[0].mxu0
      %2903 = vmatprep.mubr.f32.mxu0 0.0
      %2904 = vmatmul.mubr.f32.gmra.mrb[0].mxu0 %v2546
      %v2905 = vpop.f32.mrb[0].mxu0
      %v2906 = vadd.f32 %v2389, %v2905
      %v2907 = vpop.f32.mrb[0].mxu0
      %2908 = vmatprep.mubr.f32.mxu0 0.0
      %2909 = vmatmul.mubr.f32.gmra.mrb[0].mxu0 %v2549
      %v2910 = vpop.f32.mrb[0].mxu0
      %v2911 = vadd.f32 %v2389, %v2910
      %v2912 = vpop.f32.mrb[0].mxu0
      %2913 = vmatprep.mubr.f32.mxu0 0.0
      %2914 = vmatmul.mubr.f32.gmra.mrb[0].mxu0 %v2552
      %v2915 = vpop.f32.mrb[0].mxu0
      %v2916 = vadd.f32 %v2389, %v2915
      %v2917 = vpop.f32.mrb[0].mxu0
      %2918 = vmatprep.mubr.f32.mxu0 0.0
      %2919 = vmatmul.mubr.f32.gmra.mrb[0].mxu0 %v2555
      %v2920 = vpop.f32.mrb[0].mxu0
      %v2921 = vadd.f32 %v2389, %v2920
      %v2922 = vpop.f32.mrb[0].mxu0
      %2923 = vmatprep.mubr.f32.mxu0 0.0
      %2924 = vmatmul.mubr.f32.gmra.mrb[0].mxu0 %v2558
      %v2925 = vpop.f32.mrb[0].mxu0
      %v2926 = vadd.f32 %v2389, %v2925
      %v2927 = vpop.f32.mrb[0].mxu0
      %2928 = vmatprep.mubr.f32.mxu0 0.0
      %2929 = vmatmul.mubr.f32.gmra.mrb[0].mxu0 %v2561
      %v2930 = vpop.f32.mrb[0].mxu0
      %v2931 = vadd.f32 %v2389, %v2930
      %v2932 = vpop.f32.mrb[0].mxu0
      %2933 = vmatprep.mubr.f32.mxu0 0.0
      %2934 = vmatmul.mubr.f32.gmra.mrb[0].mxu0 %v2564
      %v2935 = vpop.f32.mrb[0].mxu0
      %v2936 = vadd.f32 %v2389, %v2935
      %v2937 = vpop.f32.mrb[0].mxu0
      %2938 = vmatprep.mubr.f32.mxu0 0.0
      %2939 = vmatmul.mubr.f32.gmra.mrb[0].mxu0 %v2567
      %v2940 = vpop.f32.mrb[0].mxu0
      %v2941 = vadd.f32 %v2389, %v2940
      %v2942 = vpop.f32.mrb[0].mxu0
      %2943 = vmatprep.mubr.f32.mxu0 0.0
      %2944 = vmatmul.mubr.f32.gmra.mrb[0].mxu0 %v2570
      %v2945 = vpop.f32.mrb[0].mxu0
      %v2946 = vadd.f32 %v2389, %v2945
      %v2947 = vpop.f32.mrb[0].mxu0
      %2948 = vmatprep.mubr.f32.mxu0 0.0
      %2949 = vmatmul.mubr.f32.gmra.mrb[0].mxu0 %v2573
      %v2950 = vpop.f32.mrb[0].mxu0
      %v2951 = vadd.f32 %v2389, %v2950
      %v2952 = vpop.f32.mrb[0].mxu0
      %2953 = vmatprep.mubr.f32.mxu0 0.0
      %2954 = vmatmul.mubr.f32.gmra.mrb[0].mxu0 %v2576
      %v2955 = vpop.f32.mrb[0].mxu0
      %v2956 = vadd.f32 %v2389, %v2955
      %v2957 = vpop.f32.mrb[0].mxu0
      %2958 = vmatprep.mubr.f32.mxu0 0.0
      %2959 = vmatmul.mubr.f32.gmra.mrb[0].mxu0 %v2579
      %v2960 = vpop.f32.mrb[0].mxu0
      %v2961 = vadd.f32 %v2389, %v2960
      %v2962 = vpop.f32.mrb[0].mxu0
      %2963 = vmatprep.mubr.f32.mxu0 0.0
      %2964 = vmatmul.mubr.f32.gmra.mrb[0].mxu0 %v2582
      %v2965 = vpop.f32.mrb[0].mxu0
      %v2966 = vadd.f32 %v2389, %v2965
      %v2967 = vpop.f32.mrb[0].mxu0
      %2968 = vdwg.mxu0
      %vm2969 = vcmask 64512
      %2970 = vst.msk [vmem:[%s302] sm:$0xff] %vm2969, %v2651
      %2971 = vst.msk [vmem:[%s302 + $0x8] sm:$0xff] %vm2969, %v2656
      %2972 = vst.msk [vmem:[%s302 + $0x10] sm:$0xff] %vm2969, %v2661
      %2973 = vst.msk [vmem:[%s302 + $0x18] sm:$0xff] %vm2969, %v2666
      %2974 = vst.msk [vmem:[%s302 + $0x20] sm:$0xff] %vm2969, %v2671
      %2975 = vst.msk [vmem:[%s302 + $0x28] sm:$0xff] %vm2969, %v2676
      %2976 = vst.msk [vmem:[%s302 + $0x30] sm:$0xff] %vm2969, %v2681
      %2977 = vst.msk [vmem:[%s302 + $0x38] sm:$0xff] %vm2969, %v2686
      %2978 = vst.msk [vmem:[%s302 + $0x40] sm:$0xff] %vm2969, %v2691
      %2979 = vst.msk [vmem:[%s302 + $0x48] sm:$0xff] %vm2969, %v2696
      %2980 = vst.msk [vmem:[%s302 + $0x50] sm:$0xff] %vm2969, %v2701
      %2981 = vst.msk [vmem:[%s302 + $0x58] sm:$0xff] %vm2969, %v2706
      %2982 = vst.msk [vmem:[%s302 + $0x60] sm:$0xff] %vm2969, %v2711
      %2983 = vst.msk [vmem:[%s302 + $0x68] sm:$0xff] %vm2969, %v2716
      %2984 = vst.msk [vmem:[%s302 + $0x70] sm:$0xff] %vm2969, %v2721
      %2985 = vst.msk [vmem:[%s302 + $0x78] sm:$0xff] %vm2969, %v2726
      %2986 = vst.msk [vmem:[%s302 + $0x80] sm:$0xff] %vm2969, %v2731
      %2987 = vst.msk [vmem:[%s302 + $0x88] sm:$0xff] %vm2969, %v2736
      %2988 = vst.msk [vmem:[%s302 + $0x90] sm:$0xff] %vm2969, %v2741
      %2989 = vst.msk [vmem:[%s302 + $0x98] sm:$0xff] %vm2969, %v2746
      %2990 = vst.msk [vmem:[%s302 + $0xa0] sm:$0xff] %vm2969, %v2751
      %2991 = vst.msk [vmem:[%s302 + $0xa8] sm:$0xff] %vm2969, %v2756
      %2992 = vst.msk [vmem:[%s302 + $0xb0] sm:$0xff] %vm2969, %v2761
      %2993 = vst.msk [vmem:[%s302 + $0xb8] sm:$0xff] %vm2969, %v2766
      %2994 = vst.msk [vmem:[%s302 + $0xc0] sm:$0xff] %vm2969, %v2771
      %2995 = vst.msk [vmem:[%s302 + $0xc8] sm:$0xff] %vm2969, %v2776
      %2996 = vst.msk [vmem:[%s302 + $0xd0] sm:$0xff] %vm2969, %v2781
      %2997 = vst.msk [vmem:[%s302 + $0xd8] sm:$0xff] %vm2969, %v2786
      %2998 = vst.msk [vmem:[%s302 + $0xe0] sm:$0xff] %vm2969, %v2791
      %2999 = vst.msk [vmem:[%s302 + $0xe8] sm:$0xff] %vm2969, %v2796
      %3000 = vst.msk [vmem:[%s302 + $0xf0] sm:$0xff] %vm2969, %v2801
      %3001 = vst.msk [vmem:[%s302 + $0xf8] sm:$0xff] %vm2969, %v2806
      %3002 = vst.msk [vmem:[%s302 + $0x100] sm:$0xff] %vm2969, %v2811
      %3003 = vst.msk [vmem:[%s302 + $0x108] sm:$0xff] %vm2969, %v2816
      %3004 = vst.msk [vmem:[%s302 + $0x110] sm:$0xff] %vm2969, %v2821
      %3005 = vst.msk [vmem:[%s302 + $0x118] sm:$0xff] %vm2969, %v2826
      %3006 = vst.msk [vmem:[%s302 + $0x120] sm:$0xff] %vm2969, %v2831
      %3007 = vst.msk [vmem:[%s302 + $0x128] sm:$0xff] %vm2969, %v2836
      %3008 = vst.msk [vmem:[%s302 + $0x130] sm:$0xff] %vm2969, %v2841
      %3009 = vst.msk [vmem:[%s302 + $0x138] sm:$0xff] %vm2969, %v2846
      %3010 = vst.msk [vmem:[%s302 + $0x140] sm:$0xff] %vm2969, %v2851
      %3011 = vst.msk [vmem:[%s302 + $0x148] sm:$0xff] %vm2969, %v2856
      %3012 = vst.msk [vmem:[%s302 + $0x150] sm:$0xff] %vm2969, %v2861
      %3013 = vst.msk [vmem:[%s302 + $0x158] sm:$0xff] %vm2969, %v2866
      %3014 = vst.msk [vmem:[%s302 + $0x160] sm:$0xff] %vm2969, %v2871
      %3015 = vst.msk [vmem:[%s302 + $0x168] sm:$0xff] %vm2969, %v2876
      %3016 = vst.msk [vmem:[%s302 + $0x170] sm:$0xff] %vm2969, %v2881
      %3017 = vst.msk [vmem:[%s302 + $0x178] sm:$0xff] %vm2969, %v2886
      %3018 = vst.msk [vmem:[%s302 + $0x180] sm:$0xff] %vm2969, %v2891
      %3019 = vst.msk [vmem:[%s302 + $0x188] sm:$0xff] %vm2969, %v2896
      %3020 = vst.msk [vmem:[%s302 + $0x190] sm:$0xff] %vm2969, %v2901
      %3021 = vst.msk [vmem:[%s302 + $0x198] sm:$0xff] %vm2969, %v2906
      %3022 = vst.msk [vmem:[%s302 + $0x1a0] sm:$0xff] %vm2969, %v2911
      %3023 = vst.msk [vmem:[%s302 + $0x1a8] sm:$0xff] %vm2969, %v2916
      %3024 = vst.msk [vmem:[%s302 + $0x1b0] sm:$0xff] %vm2969, %v2921
      %3025 = vst.msk [vmem:[%s302 + $0x1b8] sm:$0xff] %vm2969, %v2926
      %3026 = vst.msk [vmem:[%s302 + $0x1c0] sm:$0xff] %vm2969, %v2931
      %3027 = vst.msk [vmem:[%s302 + $0x1c8] sm:$0xff] %vm2969, %v2936
      %3028 = vst.msk [vmem:[%s302 + $0x1d0] sm:$0xff] %vm2969, %v2941
      %3029 = vst.msk [vmem:[%s302 + $0x1d8] sm:$0xff] %vm2969, %v2946
      %3030 = vst.msk [vmem:[%s302 + $0x1e0] sm:$0xff] %vm2969, %v2951
      %3031 = vst.msk [vmem:[%s302 + $0x1e8] sm:$0xff] %vm2969, %v2956
      %3032 = vst.msk [vmem:[%s302 + $0x1f0] sm:$0xff] %vm2969, %v2961
      %3033 = vst.msk [vmem:[%s302 + $0x1f8] sm:$0xff] %vm2969, %v2966
      %s3034 = smul.u32 64, %s18
      %p3035 = scmp.lt.s32.totalorder %s3034, 127
      %s3036 = scalar_select %p3035, %s3034, 127
      %s3037 = smul.addr %s3036, 8
      %s3038 = scalar_lea.vmem %s7, %s3037
      // Predicated region
      $region49: #{edge_regression_head.1} parent=47 // pred_check
        %p3039 = pneg %p193
      $region50: #{edge_regression_head.1} parent=47 // pred_check_branch
        %3041 = sbr.rel (%p3039) target = $region52
      $region51: #{edge_regression_head.1} parent=47 // pred_region
        %s3042 = smul.u32 64, %s18
      $region52: #{edge_regression_head.1} parent=47 // pred_fallthru
        _
    $region48: #{edge_regression_head.1} parent=5 // pred_fallthru
      _
    %p3043 = scmp.le.s32.totalorder 2, %s13
    // Predicated region
    $region53: #{edge_regression_head.1} parent=5 // pred_check
      %p3044 = pneg %p3043
    $region54: #{edge_regression_head.1} parent=5 // pred_check_branch
      %3046 = sbr.rel (%p3044) target = $region56
    $region55: #{edge_regression_head.1} parent=5 // pred_region
      %s3047 = ssub.s32 %s13, 2
      // Predicated region
      $region57: #{edge_regression_head.1} parent=55 // pred_check
        %p3048 = pneg %p199
      $region58: #{edge_regression_head.1} parent=55 // pred_check_branch
        %3050 = sbr.rel (%p3048) target = $region60
      $region59: #{edge_regression_head.1} parent=55 // pred_region
        %s3051 = smul.u32 64, %s19
        %p3052 = scmp.lt.s32.totalorder %s3051, 127
        %s3053 = scalar_select %p3052, %s3051, 127
        %s3054 = smul.addr %s3053, 8
        %s3055 = scalar_lea.vmem %s7, %s3054
      $region60: #{edge_regression_head.1} parent=55 // pred_fallthru
        _
    $region56: #{edge_regression_head.1} parent=5 // pred_fallthru
      _
  $region6: #{edge_regression_head.1} parent=0 // loop_footer
    %s17 = sadd.s32 1, %s13
  $region7: #{edge_regression_head.1} parent=0 // loop_footer_branch
    %12 = sbr.rel target = $region3
  $region8: #{edge_regression_head.1} parent=0 // loop_exit
    _

</llo_original>
